<compile_context>
chip_gen: v7x
topology: tpu7x:2x2x1
jax: 0.10.0
libtpu: 0.0.40
codegen_flags: <defaults>
</compile_context>

<pallas_src>
from functools import partial

import numpy as np
import jax
import jax.numpy as jnp
from jax.experimental import pallas as pl
from jax.experimental.pallas import tpu as pltpu

ALIGN_CORNERS = False  # F.grid_sample default since PyTorch 1.3


def _grid_sample_kernel(img_ref, grid_ref, out_ref, *, h_in, w_in, align_corners):
    # img_ref : (1, C, P)   f32, P = h_in * w_in (source image rows flattened row-major)
    # grid_ref: (1, 2, Qt)  f32, row 0 = x (width coord), row 1 = y (height coord), in [-1, 1]
    # out_ref : (1, C, Qt)  f32
    img = img_ref[0]                    # (C, P)
    g = grid_ref[0]                     # (2, Qt)
    gx = g[0:1, :]                      # (1, Qt)
    gy = g[1:2, :]                      # (1, Qt)

    if align_corners:
        ix = (gx + 1.0) * (0.5 * (w_in - 1))
        iy = (gy + 1.0) * (0.5 * (h_in - 1))
    else:
        ix = ((gx + 1.0) * w_in - 1.0) * 0.5
        iy = ((gy + 1.0) * h_in - 1.0) * 0.5

    x0f = jnp.floor(ix)
    y0f = jnp.floor(iy)
    fx = ix - x0f
    fy = iy - y0f
    x0 = x0f.astype(jnp.int32)
    y0 = y0f.astype(jnp.int32)

    P = img.shape[1]
    Qt = out_ref.shape[2]
    # Hoisted out of the corner loop (JAX does not CSE broadcast_in_dim).
    pidx = jax.lax.broadcasted_iota(jnp.int32, (P, Qt), 0)

    # Build the (P, Qt) selection/weight matrix for the 4 bilinear corners.
    sel = jnp.zeros((P, Qt), jnp.float32)
    for dy in (0, 1):
        wy = fy if dy else (1.0 - fy)
        yc = y0 + dy
        yok = jnp.logical_and(yc >= 0, yc < h_in)
        ycc = jnp.clip(yc, 0, h_in - 1)
        for dx in (0, 1):
            wx = fx if dx else (1.0 - fx)
            xc = x0 + dx
            ok = jnp.logical_and(yok, jnp.logical_and(xc >= 0, xc < w_in))
            xcc = jnp.clip(xc, 0, w_in - 1)
            w = jnp.where(ok, wy * wx, 0.0)              # (1, Qt); zero-padding handled here
            flat = ycc * w_in + xcc                      # (1, Qt) flattened source index
            sel = sel + jnp.where(pidx == flat, w, 0.0)  # (P, Qt)

    # Single MXU matmul per tile: (C, P) @ (P, Qt) -> (C, Qt)
    out_ref[0] = jnp.dot(img, sel, preferred_element_type=jnp.float32)


def _pick_q_tile(q):
    """Largest output-pixel tile that is a multiple of 128 and divides Q (else full Q)."""
    if q % 128 != 0:
        return q
    for cand in (2048, 1024, 512, 256, 128):
        if cand <= q and q % cand == 0:
            return cand
    return q


def wasp_warper(input_img, input_grid, align_corners=ALIGN_CORNERS):
    """Equivalent of waspWarper.forward.

    input_img : (N, C, H_in, W_in)
    input_grid: (N, 2, H_out, W_out)  -- channel 0 = x, channel 1 = y, normalized to [-1, 1]
    returns   : (N, C, H_out, W_out)
    """
    N, C, Hin, Win = input_img.shape
    Ng, two, Hout, Wout = input_grid.shape
    assert Ng == N and two == 2
    P = Hin * Win
    Q = Hout * Wout
    Qt = _pick_q_tile(Q)

    img = input_img.reshape(N, C, P).astype(jnp.float32)    # free reshape (no transpose)
    grd = input_grid.reshape(N, 2, Q).astype(jnp.float32)   # free reshape (no transpose)

    kernel = partial(_grid_sample_kernel, h_in=Hin, w_in=Win, align_corners=align_corners)

    out = pl.pallas_call(
        kernel,
        out_shape=jax.ShapeDtypeStruct((N, C, Q), jnp.float32),
        grid=(N, Q // Qt),
        in_specs=[
            pl.BlockSpec((1, C, P), lambda n, q: (n, 0, 0)),    # source image stays resident per n
            pl.BlockSpec((1, 2, Qt), lambda n, q: (n, 0, q)),   # grid coords for this tile
        ],
        out_specs=pl.BlockSpec((1, C, Qt), lambda n, q: (n, 0, q)),
        compiler_params=pltpu.CompilerParams(
            dimension_semantics=("parallel", "parallel")),
    )(img, grd)

    # TODO(synk): for very large H_in*W_in, also tile the contraction (P) via a manual DMA
    # gather of only the needed source rows instead of the dense one-hot selection matrix.
    return out.reshape(N, C, Hout, Wout)   # free reshape; stays in NCHW like the PyTorch module


def _numpy_grid_sample(img, grid_nchw, align_corners=ALIGN_CORNERS):
    """Reference: F.grid_sample(img, grid.permute(0,2,3,1)) bilinear / zeros padding."""
    grid = np.transpose(grid_nchw, (0, 2, 3, 1))  # (N, Hout, Wout, 2)
    N, C, Hin, Win = img.shape
    _, Hout, Wout, _ = grid.shape
    gx = grid[..., 0].astype(np.float32)
    gy = grid[..., 1].astype(np.float32)
    if align_corners:
        ix = (gx + 1.0) * 0.5 * (Win - 1)
        iy = (gy + 1.0) * 0.5 * (Hin - 1)
    else:
        ix = ((gx + 1.0) * Win - 1.0) * 0.5
        iy = ((gy + 1.0) * Hin - 1.0) * 0.5
    x0 = np.floor(ix).astype(np.int64)
    y0 = np.floor(iy).astype(np.int64)
    fx = ix - x0
    fy = iy - y0
    out = np.zeros((N, C, Hout, Wout), np.float32)
    for dy in (0, 1):
        for dx in (0, 1):
            xc = x0 + dx
            yc = y0 + dy
            w = (fy if dy else (1.0 - fy)) * (fx if dx else (1.0 - fx))
            valid = (xc >= 0) & (xc < Win) & (yc >= 0) & (yc < Hin)
            xcc = np.clip(xc, 0, Win - 1)
            ycc = np.clip(yc, 0, Hin - 1)
            for n in range(N):
                vals = img[n][:, ycc[n], xcc[n]]               # (C, Hout, Wout)
                out[n] += vals * (w[n] * valid[n])[None].astype(np.float32)
    return out


if __name__ == "__main__":
    N, C, Hin, Win = 2, 4, 16, 16
    Hout, Wout = 16, 16

    key = jax.random.PRNGKey(0)
    k_img, k_warp = jax.random.split(key)
    input_img = jax.random.normal(k_img, (N, C, Hin, Win), jnp.float32)

    # Identity sampling grid + random warp (some coords go slightly out of [-1,1]
    # to exercise the zero-padding path).
    ys = jnp.linspace(-1.0, 1.0, Hout)
    xs = jnp.linspace(-1.0, 1.0, Wout)
    gy, gx = jnp.meshgrid(ys, xs, indexing="ij")
    base = jnp.stack([gx, gy], axis=0)                               # (2, Hout, Wout): ch0=x, ch1=y
    noise = 0.15 * jax.random.normal(k_warp, (N, 2, Hout, Wout), jnp.float32)
    input_grid = base[None] + noise                                  # (N, 2, Hout, Wout)

    out = wasp_warper(input_img, input_grid)
    out = jax.block_until_ready(out)

    ref = _numpy_grid_sample(np.asarray(input_img), np.asarray(input_grid))
    assert out.shape == (N, C, Hout, Wout), out.shape
    np.testing.assert_allclose(np.asarray(out), ref, rtol=1e-4, atol=1e-4)

    print("KERNEL_OK")
</pallas_src>

<mosaic_0001>
module attributes {stable_mosaic.version = 11 : i64} {
  func.func @_grid_sample_kernel(%arg0: i32, %arg1: i32, %arg2: memref<1x4x256xf32, #tpu.memory_space<vmem>>, %arg3: memref<1x2x256xf32, #tpu.memory_space<vmem>>, %arg4: memref<1x4x256xf32, #tpu.memory_space<vmem>>) attributes {dimension_semantics = [#tpu.dimension_semantics<parallel>, #tpu.dimension_semantics<parallel>], iteration_bounds = array<i64: 2, 1>, scalar_prefetch = 0 : i64, scratch_operands = 0 : i64, tpu.core_type = #tpu.core_type<tc>, window_params = [{transform_indices = @transform_0, window_bounds = array<i64: 1, 4, 256>}, {transform_indices = @transform_1, window_bounds = array<i64: 1, 2, 256>}, {transform_indices = @transform_2, window_bounds = array<i64: 1, 4, 256>}]} {
    %c0 = arith.constant 0 : index
    %c0_0 = arith.constant 0 : index
    %c0_1 = arith.constant 0 : index
    %0 = vector.load %arg2[%c0, %c0_0, %c0_1] : memref<1x4x256xf32, #tpu.memory_space<vmem>>, vector<1x4x256xf32>
    %1 = vector.shape_cast %0 : vector<1x4x256xf32> to vector<4x256xf32>
    %c0_2 = arith.constant 0 : index
    %c0_3 = arith.constant 0 : index
    %c0_4 = arith.constant 0 : index
    %2 = vector.load %arg3[%c0_2, %c0_3, %c0_4] : memref<1x2x256xf32, #tpu.memory_space<vmem>>, vector<1x2x256xf32>
    %3 = vector.shape_cast %2 : vector<1x2x256xf32> to vector<2x256xf32>
    %4 = vector.extract_strided_slice %3 {offsets = [0, 0], sizes = [1, 256], strides = [1, 1]} : vector<2x256xf32> to vector<1x256xf32>
    %5 = vector.extract_strided_slice %3 {offsets = [1, 0], sizes = [1, 256], strides = [1, 1]} : vector<2x256xf32> to vector<1x256xf32>
    %cst = arith.constant 1.000000e+00 : f32
    %6 = vector.broadcast %cst : f32 to vector<1x256xf32>
    %7 = arith.addf %4, %6 : vector<1x256xf32>
    %cst_5 = arith.constant 1.600000e+01 : f32
    %8 = vector.broadcast %cst_5 : f32 to vector<1x256xf32>
    %9 = arith.mulf %7, %8 : vector<1x256xf32>
    %cst_6 = arith.constant 1.000000e+00 : f32
    %10 = vector.broadcast %cst_6 : f32 to vector<1x256xf32>
    %11 = arith.subf %9, %10 : vector<1x256xf32>
    %cst_7 = arith.constant 5.000000e-01 : f32
    %12 = vector.broadcast %cst_7 : f32 to vector<1x256xf32>
    %13 = arith.mulf %11, %12 : vector<1x256xf32>
    %cst_8 = arith.constant 1.000000e+00 : f32
    %14 = vector.broadcast %cst_8 : f32 to vector<1x256xf32>
    %15 = arith.addf %5, %14 : vector<1x256xf32>
    %cst_9 = arith.constant 1.600000e+01 : f32
    %16 = vector.broadcast %cst_9 : f32 to vector<1x256xf32>
    %17 = arith.mulf %15, %16 : vector<1x256xf32>
    %cst_10 = arith.constant 1.000000e+00 : f32
    %18 = vector.broadcast %cst_10 : f32 to vector<1x256xf32>
    %19 = arith.subf %17, %18 : vector<1x256xf32>
    %cst_11 = arith.constant 5.000000e-01 : f32
    %20 = vector.broadcast %cst_11 : f32 to vector<1x256xf32>
    %21 = arith.mulf %19, %20 : vector<1x256xf32>
    %22 = math.floor %13 : vector<1x256xf32>
    %23 = math.floor %21 : vector<1x256xf32>
    %24 = arith.subf %13, %22 : vector<1x256xf32>
    %25 = arith.subf %21, %23 : vector<1x256xf32>
    %26 = arith.fptosi %22 : vector<1x256xf32> to vector<1x256xi32>
    %27 = arith.fptosi %23 : vector<1x256xf32> to vector<1x256xi32>
    %28 = tpu.iota {dimensions = array<i32: 0>} : vector<256x256xi32>
    %cst_12 = arith.constant 0.000000e+00 : f32
    %29 = vector.broadcast %cst_12 : f32 to vector<256x256xf32>
    %cst_13 = arith.constant 1.000000e+00 : f32
    %30 = vector.broadcast %cst_13 : f32 to vector<1x256xf32>
    %31 = arith.subf %30, %25 : vector<1x256xf32>
    %c0_i32 = arith.constant 0 : i32
    %32 = vector.broadcast %c0_i32 : i32 to vector<1x256xi32>
    %33 = arith.addi %27, %32 : vector<1x256xi32>
    %c0_i32_14 = arith.constant 0 : i32
    %34 = vector.broadcast %c0_i32_14 : i32 to vector<1x256xi32>
    %35 = arith.cmpi sge, %33, %34 : vector<1x256xi32>
    %c16_i32 = arith.constant 16 : i32
    %36 = vector.broadcast %c16_i32 : i32 to vector<1x256xi32>
    %37 = arith.cmpi slt, %33, %36 : vector<1x256xi32>
    %38 = arith.andi %35, %37 : vector<1x256xi1>
    %c0_i32_15 = arith.constant 0 : i32
    %c15_i32 = arith.constant 15 : i32
    %39 = vector.broadcast %c0_i32_15 : i32 to vector<1x256xi32>
    %40 = arith.maxsi %39, %33 : vector<1x256xi32>
    %41 = vector.broadcast %c15_i32 : i32 to vector<1x256xi32>
    %42 = arith.minsi %41, %40 : vector<1x256xi32>
    %cst_16 = arith.constant 1.000000e+00 : f32
    %43 = vector.broadcast %cst_16 : f32 to vector<1x256xf32>
    %44 = arith.subf %43, %24 : vector<1x256xf32>
    %c0_i32_17 = arith.constant 0 : i32
    %45 = vector.broadcast %c0_i32_17 : i32 to vector<1x256xi32>
    %46 = arith.addi %26, %45 : vector<1x256xi32>
    %c0_i32_18 = arith.constant 0 : i32
    %47 = vector.broadcast %c0_i32_18 : i32 to vector<1x256xi32>
    %48 = arith.cmpi sge, %46, %47 : vector<1x256xi32>
    %c16_i32_19 = arith.constant 16 : i32
    %49 = vector.broadcast %c16_i32_19 : i32 to vector<1x256xi32>
    %50 = arith.cmpi slt, %46, %49 : vector<1x256xi32>
    %51 = arith.andi %48, %50 : vector<1x256xi1>
    %52 = arith.andi %38, %51 : vector<1x256xi1>
    %c0_i32_20 = arith.constant 0 : i32
    %c15_i32_21 = arith.constant 15 : i32
    %53 = vector.broadcast %c0_i32_20 : i32 to vector<1x256xi32>
    %54 = arith.maxsi %53, %46 : vector<1x256xi32>
    %55 = vector.broadcast %c15_i32_21 : i32 to vector<1x256xi32>
    %56 = arith.minsi %55, %54 : vector<1x256xi32>
    %57 = arith.mulf %31, %44 : vector<1x256xf32>
    %cst_22 = arith.constant 0.000000e+00 : f32
    %58 = vector.broadcast %cst_22 : f32 to vector<1x256xf32>
    %59 = arith.select %52, %57, %58 : vector<1x256xi1>, vector<1x256xf32>
    %c16_i32_23 = arith.constant 16 : i32
    %60 = vector.broadcast %c16_i32_23 : i32 to vector<1x256xi32>
    %61 = arith.muli %42, %60 : vector<1x256xi32>
    %62 = arith.addi %61, %56 : vector<1x256xi32>
    %63 = vector.broadcast %62 : vector<1x256xi32> to vector<256x256xi32>
    %64 = arith.cmpi eq, %28, %63 : vector<256x256xi32>
    %cst_24 = arith.constant 0.000000e+00 : f32
    %65 = vector.shape_cast %59 : vector<1x256xf32> to vector<1x256xf32>
    %66 = vector.broadcast %65 : vector<1x256xf32> to vector<256x256xf32>
    %67 = vector.broadcast %cst_24 : f32 to vector<256x256xf32>
    %68 = arith.select %64, %66, %67 : vector<256x256xi1>, vector<256x256xf32>
    %69 = arith.addf %29, %68 : vector<256x256xf32>
    %c1_i32 = arith.constant 1 : i32
    %70 = vector.broadcast %c1_i32 : i32 to vector<1x256xi32>
    %71 = arith.addi %26, %70 : vector<1x256xi32>
    %c0_i32_25 = arith.constant 0 : i32
    %72 = vector.broadcast %c0_i32_25 : i32 to vector<1x256xi32>
    %73 = arith.cmpi sge, %71, %72 : vector<1x256xi32>
    %c16_i32_26 = arith.constant 16 : i32
    %74 = vector.broadcast %c16_i32_26 : i32 to vector<1x256xi32>
    %75 = arith.cmpi slt, %71, %74 : vector<1x256xi32>
    %76 = arith.andi %73, %75 : vector<1x256xi1>
    %77 = arith.andi %38, %76 : vector<1x256xi1>
    %c0_i32_27 = arith.constant 0 : i32
    %c15_i32_28 = arith.constant 15 : i32
    %78 = vector.broadcast %c0_i32_27 : i32 to vector<1x256xi32>
    %79 = arith.maxsi %78, %71 : vector<1x256xi32>
    %80 = vector.broadcast %c15_i32_28 : i32 to vector<1x256xi32>
    %81 = arith.minsi %80, %79 : vector<1x256xi32>
    %82 = arith.mulf %31, %24 : vector<1x256xf32>
    %cst_29 = arith.constant 0.000000e+00 : f32
    %83 = vector.broadcast %cst_29 : f32 to vector<1x256xf32>
    %84 = arith.select %77, %82, %83 : vector<1x256xi1>, vector<1x256xf32>
    %c16_i32_30 = arith.constant 16 : i32
    %85 = vector.broadcast %c16_i32_30 : i32 to vector<1x256xi32>
    %86 = arith.muli %42, %85 : vector<1x256xi32>
    %87 = arith.addi %86, %81 : vector<1x256xi32>
    %88 = vector.broadcast %87 : vector<1x256xi32> to vector<256x256xi32>
    %89 = arith.cmpi eq, %28, %88 : vector<256x256xi32>
    %cst_31 = arith.constant 0.000000e+00 : f32
    %90 = vector.shape_cast %84 : vector<1x256xf32> to vector<1x256xf32>
    %91 = vector.broadcast %90 : vector<1x256xf32> to vector<256x256xf32>
    %92 = vector.broadcast %cst_31 : f32 to vector<256x256xf32>
    %93 = arith.select %89, %91, %92 : vector<256x256xi1>, vector<256x256xf32>
    %94 = arith.addf %69, %93 : vector<256x256xf32>
    %c1_i32_32 = arith.constant 1 : i32
    %95 = vector.broadcast %c1_i32_32 : i32 to vector<1x256xi32>
    %96 = arith.addi %27, %95 : vector<1x256xi32>
    %c0_i32_33 = arith.constant 0 : i32
    %97 = vector.broadcast %c0_i32_33 : i32 to vector<1x256xi32>
    %98 = arith.cmpi sge, %96, %97 : vector<1x256xi32>
    %c16_i32_34 = arith.constant 16 : i32
    %99 = vector.broadcast %c16_i32_34 : i32 to vector<1x256xi32>
    %100 = arith.cmpi slt, %96, %99 : vector<1x256xi32>
    %101 = arith.andi %98, %100 : vector<1x256xi1>
    %c0_i32_35 = arith.constant 0 : i32
    %c15_i32_36 = arith.constant 15 : i32
    %102 = vector.broadcast %c0_i32_35 : i32 to vector<1x256xi32>
    %103 = arith.maxsi %102, %96 : vector<1x256xi32>
    %104 = vector.broadcast %c15_i32_36 : i32 to vector<1x256xi32>
    %105 = arith.minsi %104, %103 : vector<1x256xi32>
    %cst_37 = arith.constant 1.000000e+00 : f32
    %106 = vector.broadcast %cst_37 : f32 to vector<1x256xf32>
    %107 = arith.subf %106, %24 : vector<1x256xf32>
    %c0_i32_38 = arith.constant 0 : i32
    %108 = vector.broadcast %c0_i32_38 : i32 to vector<1x256xi32>
    %109 = arith.addi %26, %108 : vector<1x256xi32>
    %c0_i32_39 = arith.constant 0 : i32
    %110 = vector.broadcast %c0_i32_39 : i32 to vector<1x256xi32>
    %111 = arith.cmpi sge, %109, %110 : vector<1x256xi32>
    %c16_i32_40 = arith.constant 16 : i32
    %112 = vector.broadcast %c16_i32_40 : i32 to vector<1x256xi32>
    %113 = arith.cmpi slt, %109, %112 : vector<1x256xi32>
    %114 = arith.andi %111, %113 : vector<1x256xi1>
    %115 = arith.andi %101, %114 : vector<1x256xi1>
    %c0_i32_41 = arith.constant 0 : i32
    %c15_i32_42 = arith.constant 15 : i32
    %116 = vector.broadcast %c0_i32_41 : i32 to vector<1x256xi32>
    %117 = arith.maxsi %116, %109 : vector<1x256xi32>
    %118 = vector.broadcast %c15_i32_42 : i32 to vector<1x256xi32>
    %119 = arith.minsi %118, %117 : vector<1x256xi32>
    %120 = arith.mulf %25, %107 : vector<1x256xf32>
    %cst_43 = arith.constant 0.000000e+00 : f32
    %121 = vector.broadcast %cst_43 : f32 to vector<1x256xf32>
    %122 = arith.select %115, %120, %121 : vector<1x256xi1>, vector<1x256xf32>
    %c16_i32_44 = arith.constant 16 : i32
    %123 = vector.broadcast %c16_i32_44 : i32 to vector<1x256xi32>
    %124 = arith.muli %105, %123 : vector<1x256xi32>
    %125 = arith.addi %124, %119 : vector<1x256xi32>
    %126 = vector.broadcast %125 : vector<1x256xi32> to vector<256x256xi32>
    %127 = arith.cmpi eq, %28, %126 : vector<256x256xi32>
    %cst_45 = arith.constant 0.000000e+00 : f32
    %128 = vector.shape_cast %122 : vector<1x256xf32> to vector<1x256xf32>
    %129 = vector.broadcast %128 : vector<1x256xf32> to vector<256x256xf32>
    %130 = vector.broadcast %cst_45 : f32 to vector<256x256xf32>
    %131 = arith.select %127, %129, %130 : vector<256x256xi1>, vector<256x256xf32>
    %132 = arith.addf %94, %131 : vector<256x256xf32>
    %c1_i32_46 = arith.constant 1 : i32
    %133 = vector.broadcast %c1_i32_46 : i32 to vector<1x256xi32>
    %134 = arith.addi %26, %133 : vector<1x256xi32>
    %c0_i32_47 = arith.constant 0 : i32
    %135 = vector.broadcast %c0_i32_47 : i32 to vector<1x256xi32>
    %136 = arith.cmpi sge, %134, %135 : vector<1x256xi32>
    %c16_i32_48 = arith.constant 16 : i32
    %137 = vector.broadcast %c16_i32_48 : i32 to vector<1x256xi32>
    %138 = arith.cmpi slt, %134, %137 : vector<1x256xi32>
    %139 = arith.andi %136, %138 : vector<1x256xi1>
    %140 = arith.andi %101, %139 : vector<1x256xi1>
    %c0_i32_49 = arith.constant 0 : i32
    %c15_i32_50 = arith.constant 15 : i32
    %141 = vector.broadcast %c0_i32_49 : i32 to vector<1x256xi32>
    %142 = arith.maxsi %141, %134 : vector<1x256xi32>
    %143 = vector.broadcast %c15_i32_50 : i32 to vector<1x256xi32>
    %144 = arith.minsi %143, %142 : vector<1x256xi32>
    %145 = arith.mulf %25, %24 : vector<1x256xf32>
    %cst_51 = arith.constant 0.000000e+00 : f32
    %146 = vector.broadcast %cst_51 : f32 to vector<1x256xf32>
    %147 = arith.select %140, %145, %146 : vector<1x256xi1>, vector<1x256xf32>
    %c16_i32_52 = arith.constant 16 : i32
    %148 = vector.broadcast %c16_i32_52 : i32 to vector<1x256xi32>
    %149 = arith.muli %105, %148 : vector<1x256xi32>
    %150 = arith.addi %149, %144 : vector<1x256xi32>
    %151 = vector.broadcast %150 : vector<1x256xi32> to vector<256x256xi32>
    %152 = arith.cmpi eq, %28, %151 : vector<256x256xi32>
    %cst_53 = arith.constant 0.000000e+00 : f32
    %153 = vector.shape_cast %147 : vector<1x256xf32> to vector<1x256xf32>
    %154 = vector.broadcast %153 : vector<1x256xf32> to vector<256x256xf32>
    %155 = vector.broadcast %cst_53 : f32 to vector<256x256xf32>
    %156 = arith.select %152, %154, %155 : vector<256x256xi1>, vector<256x256xf32>
    %157 = arith.addf %132, %156 : vector<256x256xf32>
    %cst_54 = arith.constant dense<0.000000e+00> : vector<4x256xf32>
    %158 = tpu.matmul %1, %157, %cst_54 {dimension_numbers = #tpu.dot_dimension_numbers<[1], [0], [0], [1], [0, 0, 1, 1], [], []>} : vector<4x256xf32>, vector<256x256xf32>, vector<4x256xf32> -> vector<4x256xf32>
    %c0_55 = arith.constant 0 : index
    %c0_56 = arith.constant 0 : index
    %c0_57 = arith.constant 0 : index
    %159 = vector.load %arg4[%c0_55, %c0_56, %c0_57] : memref<1x4x256xf32, #tpu.memory_space<vmem>>, vector<1x4x256xf32>
    %160 = vector.shape_cast %159 : vector<1x4x256xf32> to vector<4x256xf32>
    %161 = vector.shape_cast %158 : vector<4x256xf32> to vector<1x4x256xf32>
    tpu.vector_store %arg4[%c0_55, %c0_56, %c0_57], %161 {strides = array<i32>} : memref<1x4x256xf32, #tpu.memory_space<vmem>>, vector<1x4x256xf32>,
    return
  }
  func.func @transform_0(%arg0: i32, %arg1: i32) -> (i32, i32, i32) {
    %c0_i32 = arith.constant 0 : i32
    %c0_i32_0 = arith.constant 0 : i32
    %c0_i32_1 = arith.constant 0 : i32
    return %arg0, %c0_i32, %c0_i32_0 : i32, i32, i32
  }
  func.func @transform_1(%arg0: i32, %arg1: i32) -> (i32, i32, i32) {
    %c0_i32 = arith.constant 0 : i32
    %c0_i32_0 = arith.constant 0 : i32
    return %arg0, %c0_i32, %arg1 : i32, i32, i32
  }
  func.func @transform_2(%arg0: i32, %arg1: i32) -> (i32, i32, i32) {
    %c0_i32 = arith.constant 0 : i32
    %c0_i32_0 = arith.constant 0 : i32
    return %arg0, %c0_i32, %arg1 : i32, i32, i32
  }
}

</mosaic_0001>

<llo_original>
// kernel: tpu_custom_call.1
$region0: #{tpu_custom_call.1}
  #allocation0 [shape = 'u32[]', space=smem, size = 0x4, offset = 0x4, fixed_abs, tag = 'smem constant byte address 0x4 - core index']
  #allocation1 [shape = 'u32[144,128]{1,0:T(1,128)}', space=vmem, size = 0x12000, scoped, tag = 'internal scratch']
  %s0 = inlined_call_operand.hbm [shape: f32[2,4,256], index: 0, kind: input, shape index: {}]
  %s1 = inlined_call_operand.hbm [shape: f32[2,2,256], index: 1, kind: input, shape index: {}]
  %s2 = inlined_call_operand.hbm [shape: f32[2,4,256], index: 2, kind: output, shape index: {}]
  %s3 = sld [smem:[#allocation0]]
  $region49: #{tpu_custom_call.1} parent=0
    _
  %s5 = ssub.s32 1, %s3
  %s6 = scalar_select 0, %s5, %s3
  $region1: #{tpu_custom_call.1} parent=0
    #allocation2 [shape = 'u8[8192]{0}', space=vmem, size = 0x2000, scoped, tag = 'input window, operand 0']
    #allocation3 [shape = 's32[2]{0}', space=sflag, size = 0x8, scoped, tag = 'scoped memory for tpu_custom_call.1']
    #allocation4 [shape = 's32[2]{0}', space=sflag, size = 0x8, scoped, tag = 'scoped memory for tpu_custom_call.1']
    #allocation5 [shape = 'u8[4096]{0}', space=vmem, size = 0x1000, scoped, tag = 'input window, operand 1']
    #allocation6 [shape = 's32[2]{0}', space=sflag, size = 0x8, scoped, tag = 'scoped memory for tpu_custom_call.1']
    #allocation7 [shape = 'u8[8192]{0}', space=vmem, size = 0x2000, scoped, tag = 'output window, operand 0']
    %7 = vsyncpa [#allocation3], 0
    %s8 = scalar_lea.sflag [#allocation3], 1
    %9 = vsyncpa %s8, 0
    %10 = vsyncpa [#allocation6], 0
    %s11 = scalar_lea.sflag [#allocation6], 1
    %12 = vsyncpa %s11, 0
    %13 = vsyncpa [#allocation4], 0
    %s14 = scalar_lea.sflag [#allocation4], 1
    %15 = vsyncpa %s14, 0
    loop: start=0, step=1, limit=4
    $region2: #{tpu_custom_call.1} parent=1 // loop_pre_header
      _
    $region3: #{tpu_custom_call.1} parent=1 // loop_header
      %s17 = sphi 0, %s21
      %p18 = scmp.ge.s32.totalorder %s17, 4
      %s24 = sphi 0, %s36
      %s25 = sphi 0, %s32
      %s26 = sphi 0, %s24
      %s27 = sphi 0, %s25
      %s28 = sphi 0, %s26
      %s29 = sphi 0, %s27
      %s39 = sphi 0, %s41
      %s42 = sphi 0, %s39
      %s43 = sphi 0, %s42
      %s59 = sphi 0, %s43
      %s67 = sphi 0, %s69
      %s70 = sphi 0, %s67
      %s71 = sphi 0, %s70
      %s87 = sphi 0, %s71
      %s95 = sphi 0, %s97
      %s98 = sphi 0, %s95
      %s99 = sphi 0, %s98
      %s115 = sphi 0, %s99
    $region4: #{tpu_custom_call.1} parent=1 // loop_header_branch
      %20 = sbr.rel (%p18) target = $region8
    $region5: #{tpu_custom_call.1} parent=1 // loop_body
      %s22 = ssub.s32 %s17, 1
      %s23 = ssub.s32 %s17, 2
      %s30 = sadd.s32 1, %s25
      %p31 = scmp.ge.s32.totalorder %s30, 1
      %s32 = scalar_select %p31, 0, %s30
      %s33 = sadd.s32 1, %s24
      %s34 = scalar_select %p31, %s33, %s24
      %p35 = scmp.ge.s32.totalorder %s34, 2
      %s36 = scalar_select %p35, 0, %s34
      %s37 = ssub.s32 %s24, %s36
      %p38 = scmp.eq.s32.totalorder %s37, 0
      %s40 = sadd.s32 %s39, 1
      %s41 = scalar_select %p38, %s39, %s40
      %p44 = pneg %p38
      %p45 = scmp.eq.s32.totalorder %s17, 1
      %p46 = por %p44, %p45
      %p47 = scmp.ne.s32.totalorder %s39, %s42
      %p48 = scmp.eq.s32.totalorder %s17, 0
      %p49 = por %p47, %p48
      %p50 = scmp.ne.s32.totalorder %s39, %s42
      %p51 = scmp.eq.s32.totalorder %s22, 1
      %p52 = por %p50, %p51
      %p53 = scmp.ne.s32.totalorder %s42, %s43
      %p54 = scmp.eq.s32.totalorder %s22, 0
      %p55 = por %p53, %p54
      %p56 = scmp.ne.s32.totalorder %s42, %s43
      %p57 = scmp.eq.s32.totalorder %s23, 1
      %p58 = por %p56, %p57
      %p60 = scmp.ne.s32.totalorder %s43, %s59
      %p61 = scmp.eq.s32.totalorder %s23, 0
      %p62 = por %p60, %p61
      %s63 = ssub.s32 %s24, %s36
      %s64 = ssub.s32 %s25, %s32
      %s65 = sor.u32 %s63, %s64
      %p66 = scmp.eq.s32.totalorder %s65, 0
      %s68 = sadd.s32 %s67, 1
      %s69 = scalar_select %p66, %s67, %s68
      %p72 = pneg %p66
      %p73 = scmp.eq.s32.totalorder %s17, 1
      %p74 = por %p72, %p73
      %p75 = scmp.ne.s32.totalorder %s67, %s70
      %p76 = scmp.eq.s32.totalorder %s17, 0
      %p77 = por %p75, %p76
      %p78 = scmp.ne.s32.totalorder %s67, %s70
      %p79 = scmp.eq.s32.totalorder %s22, 1
      %p80 = por %p78, %p79
      %p81 = scmp.ne.s32.totalorder %s70, %s71
      %p82 = scmp.eq.s32.totalorder %s22, 0
      %p83 = por %p81, %p82
      %p84 = scmp.ne.s32.totalorder %s70, %s71
      %p85 = scmp.eq.s32.totalorder %s23, 1
      %p86 = por %p84, %p85
      %p88 = scmp.ne.s32.totalorder %s71, %s87
      %p89 = scmp.eq.s32.totalorder %s23, 0
      %p90 = por %p88, %p89
      %s91 = ssub.s32 %s24, %s36
      %s92 = ssub.s32 %s25, %s32
      %s93 = sor.u32 %s91, %s92
      %p94 = scmp.eq.s32.totalorder %s93, 0
      %s96 = sadd.s32 %s95, 1
      %s97 = scalar_select %p94, %s95, %s96
      %p100 = pneg %p94
      %p101 = scmp.eq.s32.totalorder %s17, 1
      %p102 = por %p100, %p101
      %p103 = scmp.ne.s32.totalorder %s95, %s98
      %p104 = scmp.eq.s32.totalorder %s17, 0
      %p105 = por %p103, %p104
      %p106 = scmp.ne.s32.totalorder %s95, %s98
      %p107 = scmp.eq.s32.totalorder %s22, 1
      %p108 = por %p106, %p107
      %p109 = scmp.ne.s32.totalorder %s98, %s99
      %p110 = scmp.eq.s32.totalorder %s22, 0
      %p111 = por %p109, %p110
      %p112 = scmp.ne.s32.totalorder %s98, %s99
      %p113 = scmp.eq.s32.totalorder %s23, 1
      %p114 = por %p112, %p113
      %p116 = scmp.ne.s32.totalorder %s99, %s115
      %p117 = scmp.eq.s32.totalorder %s23, 0
      %p118 = por %p116, %p117
      %p119 = scmp.le.s32.totalorder 1, %s17
      %p120 = scmp.lt.s32.totalorder %s17, 3
      %p121 = pnand %p119, %p120
      %p122 = pneg %p121
      // Predicated region
      $region9: #{tpu_custom_call.1} parent=5 // pred_check
        _
      $region10: #{tpu_custom_call.1} parent=5 // pred_check_branch
        %124 = sbr.rel (%p121) target = $region12
      $region11: #{tpu_custom_call.1} parent=5 // pred_region
        %s125 = ssub.s32 %s17, 1
      $region12: #{tpu_custom_call.1} parent=5 // pred_fallthru
        _
      %p126 = scmp.lt.s32.totalorder %s17, 2
      // Predicated region
      $region13: #{tpu_custom_call.1} parent=5 // pred_check
        %p127 = pneg %p126
      $region14: #{tpu_custom_call.1} parent=5 // pred_check_branch
        %129 = sbr.rel (%p127) target = $region16
      $region15: #{tpu_custom_call.1} parent=5 // pred_region
        // Predicated region
        $region17: #{tpu_custom_call.1} parent=15 // pred_check
          %p130 = pneg %p49
        $region18: #{tpu_custom_call.1} parent=15 // pred_check_branch
          %132 = sbr.rel (%p130) target = $region20
        $region19: #{tpu_custom_call.1} parent=15 // pred_region
          %s133 = sand.u32 %s39, 1
          %s134 = scalar_lea.sflag [#allocation3], %s133
          %s135 = sand.u32 %s39, 1
          %s136 = smul.addr %s135, 8
          %s137 = scalar_lea.vmem [#allocation2], %s136
          %s139 = ssub.s32 128, 128
          %140 = vsyncadd %s134, %s139
          %s141 = smul.addr %s24, 2
          %s142 = smul.addr %s141, 64
          %s143 = scalar_lea.hbm %s0, %s142
          %s145 = sshll.u32 %s137, 4
          %s146 = int_to_ptr.vmem [resolvable:$true] %s145
          %148 = dma.hbm_to_vmem [thread:$0]  %s143, 128, %s146, %s134
        $region20: #{tpu_custom_call.1} parent=15 // pred_fallthru
          _
        // Predicated region
        $region21: #{tpu_custom_call.1} parent=15 // pred_check
          %p149 = pneg %p77
        $region22: #{tpu_custom_call.1} parent=15 // pred_check_branch
          %151 = sbr.rel (%p149) target = $region24
        $region23: #{tpu_custom_call.1} parent=15 // pred_region
          %s152 = sand.u32 %s67, 1
          %s153 = scalar_lea.sflag [#allocation6], %s152
          %s154 = sand.u32 %s67, 1
          %s155 = smul.addr %s154, 4
          %s156 = scalar_lea.vmem [#allocation5], %s155
          %s157 = smul.u32 2, %s25
          %s159 = ssub.s32 64, 64
          %160 = vsyncadd %s153, %s159
          %s161 = smul.addr %s24, 2
          %s162 = sadd.s32 %s157, %s161
          %s163 = smul.addr %s162, 32
          %s164 = scalar_lea.hbm %s1, %s163
          %s166 = sshll.u32 %s156, 4
          %s167 = int_to_ptr.vmem [resolvable:$true] %s166
          %169 = dma.hbm_to_vmem [thread:$0]  %s164, 64, %s167, %s153
        $region24: #{tpu_custom_call.1} parent=15 // pred_fallthru
          _
      $region16: #{tpu_custom_call.1} parent=5 // pred_fallthru
        _
      %p170 = scmp.le.s32.totalorder 1, %s17
      %p171 = scmp.lt.s32.totalorder %s17, 3
      %p172 = pnand %p170, %p171
      %p173 = pneg %p172
      // Predicated region
      $region25: #{tpu_custom_call.1} parent=5 // pred_check
        _
      $region26: #{tpu_custom_call.1} parent=5 // pred_check_branch
        %175 = sbr.rel (%p172) target = $region28
      $region27: #{tpu_custom_call.1} parent=5 // pred_region
        %s176 = ssub.s32 %s17, 1
        %s177 = sand.u32 %s42, 1
        %s178 = scalar_lea.sflag [#allocation3], %s177
        %s179 = sand.u32 %s42, 1
        %s180 = smul.addr %s179, 8
        %s181 = scalar_lea.vmem [#allocation2], %s180
        // Predicated region
        $region29: #{tpu_custom_call.1} parent=27 // pred_check
          %p182 = pneg %p55
        $region30: #{tpu_custom_call.1} parent=27 // pred_check_branch
          %184 = sbr.rel (%p182) target = $region32
        $region31: #{tpu_custom_call.1} parent=27 // pred_region
          %185 = dma.done %s178, 128
        $region32: #{tpu_custom_call.1} parent=27 // pred_fallthru
          _
        %s186 = sand.u32 %s70, 1
        %s187 = scalar_lea.sflag [#allocation6], %s186
        %s188 = sand.u32 %s70, 1
        %s189 = smul.addr %s188, 4
        %s190 = scalar_lea.vmem [#allocation5], %s189
        // Predicated region
        $region33: #{tpu_custom_call.1} parent=27 // pred_check
          %p191 = pneg %p83
        $region34: #{tpu_custom_call.1} parent=27 // pred_check_branch
          %193 = sbr.rel (%p191) target = $region36
        $region35: #{tpu_custom_call.1} parent=27 // pred_region
          %194 = dma.done %s187, 64
        $region36: #{tpu_custom_call.1} parent=27 // pred_fallthru
          _
        %s195 = sand.u32 %s42, 1
        %s196 = scalar_lea.sflag [#allocation3], %s195
        %s197 = sand.u32 %s42, 1
        %s198 = smul.addr %s197, 8
        %s199 = scalar_lea.vmem [#allocation2], %s198
        %p200 = pneg %p55
        %p201 = pneg %p52
        %s202 = sand.u32 %s70, 1
        %s203 = scalar_lea.sflag [#allocation6], %s202
        %s204 = sand.u32 %s70, 1
        %s205 = smul.addr %s204, 4
        %s206 = scalar_lea.vmem [#allocation5], %s205
        %p207 = pneg %p83
        %p208 = pneg %p80
        %p209 = pneg %p111
        %p210 = pneg %p108
        %s211 = sand.u32 %s98, 1
        %s212 = scalar_lea.sflag [#allocation4], %s211
        %s213 = sand.u32 %s98, 1
        %s214 = smul.addr %s213, 8
        %s215 = scalar_lea.vmem [#allocation7], %s214
        %s216 = smul.u32 2, %s27
        %s217 = smul.u32 2, %s27
        %v218 = vld [vmem:[%s181] sm:$0xff]
        %v219 = vld [vmem:[%s190] sm:$0xf]
        %v220 = vadd.f32 %v219, 1.0
        %v221 = vmul.f32 %v220, 16.0
        %v222 = vsub.f32 %v221, 1.0
        %v223 = vmul.f32 %v222, 0.5
        %v224 = vfloor.f32 %v223
        %v225 = vsub.f32 %v223, %v224
        %v226 = vcvt.f32.s32.to.zero.pseudo %v224
        %v227 = vlaneseq
        %v228 = vshrl.u32 %v227, 7
        %v229 = vadd.s32 %v228, 8
        %v230 = vadd.s32 %v228, 16
        %v231 = vadd.s32 %v228, 24
        %v232 = vadd.s32 %v228, 32
        %v233 = vadd.s32 %v228, 40
        %v234 = vadd.s32 %v228, 48
        %v235 = vadd.s32 %v228, 56
        %v236 = vadd.s32 %v228, 64
        %v237 = vadd.s32 %v228, 72
        %v238 = vadd.s32 %v228, 80
        %v239 = vadd.s32 %v228, 88
        %v240 = vadd.s32 %v228, 96
        %v241 = vadd.s32 %v228, 104
        %v242 = vadd.s32 %v228, 112
        %v243 = vadd.s32 %v228, 120
        %v244 = vadd.s32 %v228, 128
        %v245 = vadd.s32 %v228, 136
        %v246 = vadd.s32 %v228, 144
        %v247 = vadd.s32 %v228, 152
        %v248 = vadd.s32 %v228, 160
        %v249 = vadd.s32 %v228, 168
        %v250 = vadd.s32 %v228, 176
        %v251 = vadd.s32 %v228, 184
        %v252 = vadd.s32 %v228, 192
        %v253 = vadd.s32 %v228, 200
        %v254 = vadd.s32 %v228, 208
        %v255 = vadd.s32 %v228, 216
        %v256 = vadd.s32 %v228, 224
        %v257 = vadd.s32 %v228, 232
        %v258 = vadd.s32 %v228, 240
        %v259 = vadd.s32 %v228, 248
        %v260 = vsub.f32 1.0, %v225
        %vm261 = vcmp.ge.s32.totalorder %v226, 0
        %vm262 = vcmp.lt.s32.totalorder %v226, 16
        %vm263 = vmand %vm261, %vm262
        %vm264 = vcmp.gt.s32.totalorder %v226, 0
        %v265 = vsel %vm264, %v226, 0
        %vm266 = vcmp.lt.s32.totalorder %v265, 15
        %v267 = vsel %vm266, %v265, 15
        %v268 = vsel %vm263, 1, 0
        %v269 = vrot.slane %v268, 7
        %vm270 = vcmp.ne.s32.totalorder %v269, 0
        %vm271 = vmand %vm263, %vm270
        %v273 = vrot.slane %v260, 7
        %v275 = vmul.f32 %v260, %v273
        %v276 = vsel %vm271, %v275, 0.0
        %v277 = vmul.u32 %v267, 16
        %v278 = vrot.slane %v267, 7
        %v279 = vadd.s32 %v277, %v278
        %v280 = vlaneseq
        %v281 = vshrl.u32 %v280, 7
        %v282 = vsub.s32 1, %v281
        %v283 = vrot.slane %v279, %v282
        %v284 = vlaneseq
        %v285 = vshrl.u32 %v284, 7
        %v286 = vsub.s32 3, %v285
        %v287 = vrot.slane %v279, %v286
        %v288 = vlaneseq
        %v289 = vshrl.u32 %v288, 7
        %v290 = vsub.s32 1, %v289
        %v291 = vrot.slane %v283, %v290
        %v292 = vlaneseq
        %v293 = vshrl.u32 %v292, 7
        %v294 = vsub.s32 1, %v293
        %v295 = vrot.slane %v287, %v294
        %vm296 = vcmp.eq.s32.totalorder %v228, %v291
        %vm297 = vcmp.eq.s32.totalorder %v228, %v295
        %vm298 = vcmp.eq.s32.totalorder %v229, %v291
        %vm299 = vcmp.eq.s32.totalorder %v229, %v295
        %vm300 = vcmp.eq.s32.totalorder %v230, %v291
        %vm301 = vcmp.eq.s32.totalorder %v230, %v295
        %vm302 = vcmp.eq.s32.totalorder %v231, %v291
        %vm303 = vcmp.eq.s32.totalorder %v231, %v295
        %vm304 = vcmp.eq.s32.totalorder %v232, %v291
        %vm305 = vcmp.eq.s32.totalorder %v232, %v295
        %vm306 = vcmp.eq.s32.totalorder %v233, %v291
        %vm307 = vcmp.eq.s32.totalorder %v233, %v295
        %vm308 = vcmp.eq.s32.totalorder %v234, %v291
        %vm309 = vcmp.eq.s32.totalorder %v234, %v295
        %vm310 = vcmp.eq.s32.totalorder %v235, %v291
        %vm311 = vcmp.eq.s32.totalorder %v235, %v295
        %vm312 = vcmp.eq.s32.totalorder %v236, %v291
        %vm313 = vcmp.eq.s32.totalorder %v236, %v295
        %vm314 = vcmp.eq.s32.totalorder %v237, %v291
        %vm315 = vcmp.eq.s32.totalorder %v237, %v295
        %vm316 = vcmp.eq.s32.totalorder %v238, %v291
        %vm317 = vcmp.eq.s32.totalorder %v238, %v295
        %vm318 = vcmp.eq.s32.totalorder %v239, %v291
        %vm319 = vcmp.eq.s32.totalorder %v239, %v295
        %vm320 = vcmp.eq.s32.totalorder %v240, %v291
        %vm321 = vcmp.eq.s32.totalorder %v240, %v295
        %vm322 = vcmp.eq.s32.totalorder %v241, %v291
        %vm323 = vcmp.eq.s32.totalorder %v241, %v295
        %vm324 = vcmp.eq.s32.totalorder %v242, %v291
        %vm325 = vcmp.eq.s32.totalorder %v242, %v295
        %vm326 = vcmp.eq.s32.totalorder %v243, %v291
        %vm327 = vcmp.eq.s32.totalorder %v243, %v295
        %vm328 = vcmp.eq.s32.totalorder %v244, %v291
        %vm329 = vcmp.eq.s32.totalorder %v244, %v295
        %vm330 = vcmp.eq.s32.totalorder %v245, %v291
        %vm331 = vcmp.eq.s32.totalorder %v245, %v295
        %vm332 = vcmp.eq.s32.totalorder %v246, %v291
        %vm333 = vcmp.eq.s32.totalorder %v246, %v295
        %vm334 = vcmp.eq.s32.totalorder %v247, %v291
        %vm335 = vcmp.eq.s32.totalorder %v247, %v295
        %vm336 = vcmp.eq.s32.totalorder %v248, %v291
        %vm337 = vcmp.eq.s32.totalorder %v248, %v295
        %vm338 = vcmp.eq.s32.totalorder %v249, %v291
        %vm339 = vcmp.eq.s32.totalorder %v249, %v295
        %vm340 = vcmp.eq.s32.totalorder %v250, %v291
        %vm341 = vcmp.eq.s32.totalorder %v250, %v295
        %vm342 = vcmp.eq.s32.totalorder %v251, %v291
        %vm343 = vcmp.eq.s32.totalorder %v251, %v295
        %vm344 = vcmp.eq.s32.totalorder %v252, %v291
        %vm345 = vcmp.eq.s32.totalorder %v252, %v295
        %vm346 = vcmp.eq.s32.totalorder %v253, %v291
        %vm347 = vcmp.eq.s32.totalorder %v253, %v295
        %vm348 = vcmp.eq.s32.totalorder %v254, %v291
        %vm349 = vcmp.eq.s32.totalorder %v254, %v295
        %vm350 = vcmp.eq.s32.totalorder %v255, %v291
        %vm351 = vcmp.eq.s32.totalorder %v255, %v295
        %vm352 = vcmp.eq.s32.totalorder %v256, %v291
        %vm353 = vcmp.eq.s32.totalorder %v256, %v295
        %vm354 = vcmp.eq.s32.totalorder %v257, %v291
        %vm355 = vcmp.eq.s32.totalorder %v257, %v295
        %vm356 = vcmp.eq.s32.totalorder %v258, %v291
        %vm357 = vcmp.eq.s32.totalorder %v258, %v295
        %vm358 = vcmp.eq.s32.totalorder %v259, %v291
        %vm359 = vcmp.eq.s32.totalorder %v259, %v295
        %v361 = vlaneseq
        %v362 = vshrl.u32 %v361, 7
        %v363 = vsub.s32 1, %v362
        %v364 = vrot.slane %v276, %v363
        %v365 = vlaneseq
        %v366 = vshrl.u32 %v365, 7
        %v367 = vsub.s32 3, %v366
        %v368 = vrot.slane %v276, %v367
        %v371 = vlaneseq
        %v372 = vshrl.u32 %v371, 7
        %v373 = vsub.s32 1, %v372
        %v374 = vrot.slane %v364, %v373
        %v375 = vlaneseq
        %v376 = vshrl.u32 %v375, 7
        %v377 = vsub.s32 1, %v376
        %v378 = vrot.slane %v368, %v377
        %v379 = vsel %vm296, %v374, 0.0
        %v380 = vsel %vm297, %v378, 0.0
        %v381 = vsel %vm298, %v374, 0.0
        %v382 = vsel %vm299, %v378, 0.0
        %v383 = vsel %vm300, %v374, 0.0
        %v384 = vsel %vm301, %v378, 0.0
        %v385 = vsel %vm302, %v374, 0.0
        %v386 = vsel %vm303, %v378, 0.0
        %v387 = vsel %vm304, %v374, 0.0
        %v388 = vsel %vm305, %v378, 0.0
        %v389 = vsel %vm306, %v374, 0.0
        %v390 = vsel %vm307, %v378, 0.0
        %v391 = vsel %vm308, %v374, 0.0
        %v392 = vsel %vm309, %v378, 0.0
        %v393 = vsel %vm310, %v374, 0.0
        %v394 = vsel %vm311, %v378, 0.0
        %v395 = vsel %vm312, %v374, 0.0
        %v396 = vsel %vm313, %v378, 0.0
        %v397 = vsel %vm314, %v374, 0.0
        %v398 = vsel %vm315, %v378, 0.0
        %v399 = vsel %vm316, %v374, 0.0
        %v400 = vsel %vm317, %v378, 0.0
        %v401 = vsel %vm318, %v374, 0.0
        %v402 = vsel %vm319, %v378, 0.0
        %v403 = vsel %vm320, %v374, 0.0
        %v404 = vsel %vm321, %v378, 0.0
        %v405 = vsel %vm322, %v374, 0.0
        %v406 = vsel %vm323, %v378, 0.0
        %v407 = vsel %vm324, %v374, 0.0
        %v408 = vsel %vm325, %v378, 0.0
        %v409 = vsel %vm326, %v374, 0.0
        %v410 = vsel %vm327, %v378, 0.0
        %v411 = vsel %vm328, %v374, 0.0
        %v412 = vsel %vm329, %v378, 0.0
        %v413 = vsel %vm330, %v374, 0.0
        %v414 = vsel %vm331, %v378, 0.0
        %v415 = vsel %vm332, %v374, 0.0
        %v416 = vsel %vm333, %v378, 0.0
        %v417 = vsel %vm334, %v374, 0.0
        %v418 = vsel %vm335, %v378, 0.0
        %v419 = vsel %vm336, %v374, 0.0
        %v420 = vsel %vm337, %v378, 0.0
        %v421 = vsel %vm338, %v374, 0.0
        %v422 = vsel %vm339, %v378, 0.0
        %v423 = vsel %vm340, %v374, 0.0
        %v424 = vsel %vm341, %v378, 0.0
        %v425 = vsel %vm342, %v374, 0.0
        %v426 = vsel %vm343, %v378, 0.0
        %v427 = vsel %vm344, %v374, 0.0
        %v428 = vsel %vm345, %v378, 0.0
        %v429 = vsel %vm346, %v374, 0.0
        %v430 = vsel %vm347, %v378, 0.0
        %v431 = vsel %vm348, %v374, 0.0
        %v432 = vsel %vm349, %v378, 0.0
        %v433 = vsel %vm350, %v374, 0.0
        %v434 = vsel %vm351, %v378, 0.0
        %v435 = vsel %vm352, %v374, 0.0
        %v436 = vsel %vm353, %v378, 0.0
        %v437 = vsel %vm354, %v374, 0.0
        %v438 = vsel %vm355, %v378, 0.0
        %v439 = vsel %vm356, %v374, 0.0
        %v440 = vsel %vm357, %v378, 0.0
        %v441 = vsel %vm358, %v374, 0.0
        %v442 = vsel %vm359, %v378, 0.0
        %v443 = vadd.f32 %v379, 0.0
        %v444 = vadd.f32 %v380, 0.0
        %v445 = vadd.f32 %v381, 0.0
        %v446 = vadd.f32 %v382, 0.0
        %v447 = vadd.f32 %v383, 0.0
        %v448 = vadd.f32 %v384, 0.0
        %v449 = vadd.f32 %v385, 0.0
        %v450 = vadd.f32 %v386, 0.0
        %v451 = vadd.f32 %v387, 0.0
        %v452 = vadd.f32 %v388, 0.0
        %v453 = vadd.f32 %v389, 0.0
        %v454 = vadd.f32 %v390, 0.0
        %v455 = vadd.f32 %v391, 0.0
        %v456 = vadd.f32 %v392, 0.0
        %v457 = vadd.f32 %v393, 0.0
        %v458 = vadd.f32 %v394, 0.0
        %v459 = vadd.f32 %v395, 0.0
        %v460 = vadd.f32 %v396, 0.0
        %v461 = vadd.f32 %v397, 0.0
        %v462 = vadd.f32 %v398, 0.0
        %v463 = vadd.f32 %v399, 0.0
        %v464 = vadd.f32 %v400, 0.0
        %v465 = vadd.f32 %v401, 0.0
        %v466 = vadd.f32 %v402, 0.0
        %v467 = vadd.f32 %v403, 0.0
        %v468 = vadd.f32 %v404, 0.0
        %v469 = vadd.f32 %v405, 0.0
        %v470 = vadd.f32 %v406, 0.0
        %v471 = vadd.f32 %v407, 0.0
        %v472 = vadd.f32 %v408, 0.0
        %v473 = vadd.f32 %v409, 0.0
        %v474 = vadd.f32 %v410, 0.0
        %v475 = vadd.f32 %v411, 0.0
        %v476 = vadd.f32 %v412, 0.0
        %v477 = vadd.f32 %v413, 0.0
        %v478 = vadd.f32 %v414, 0.0
        %v479 = vadd.f32 %v415, 0.0
        %v480 = vadd.f32 %v416, 0.0
        %v481 = vadd.f32 %v417, 0.0
        %v482 = vadd.f32 %v418, 0.0
        %v483 = vadd.f32 %v419, 0.0
        %v484 = vadd.f32 %v420, 0.0
        %v485 = vadd.f32 %v421, 0.0
        %v486 = vadd.f32 %v422, 0.0
        %v487 = vadd.f32 %v423, 0.0
        %v488 = vadd.f32 %v424, 0.0
        %v489 = vadd.f32 %v425, 0.0
        %v490 = vadd.f32 %v426, 0.0
        %v491 = vadd.f32 %v427, 0.0
        %v492 = vadd.f32 %v428, 0.0
        %v493 = vadd.f32 %v429, 0.0
        %v494 = vadd.f32 %v430, 0.0
        %v495 = vadd.f32 %v431, 0.0
        %v496 = vadd.f32 %v432, 0.0
        %v497 = vadd.f32 %v433, 0.0
        %v498 = vadd.f32 %v434, 0.0
        %v499 = vadd.f32 %v435, 0.0
        %v500 = vadd.f32 %v436, 0.0
        %v501 = vadd.f32 %v437, 0.0
        %v502 = vadd.f32 %v438, 0.0
        %v503 = vadd.f32 %v439, 0.0
        %v504 = vadd.f32 %v440, 0.0
        %v505 = vadd.f32 %v441, 0.0
        %v506 = vadd.f32 %v442, 0.0
        %v507 = vadd.s32 %v226, 1
        %vm508 = vcmp.ge.s32.totalorder %v507, 0
        %vm509 = vcmp.lt.s32.totalorder %v507, 16
        %vm510 = vmand %vm508, %vm509
        %v511 = vsel %vm510, 1, 0
        %v512 = vrot.slane %v511, 7
        %vm513 = vcmp.ne.s32.totalorder %v512, 0
        %vm514 = vmand %vm263, %vm513
        %vm515 = vcmp.gt.s32.totalorder %v507, 0
        %v516 = vsel %vm515, %v507, 0
        %vm517 = vcmp.lt.s32.totalorder %v516, 15
        %v518 = vsel %vm517, %v516, 15
        %v520 = vrot.slane %v225, 7
        %v522 = vmul.f32 %v260, %v520
        %v523 = vsel %vm514, %v522, 0.0
        %v524 = vrot.slane %v518, 7
        %v525 = vadd.s32 %v277, %v524
        %v526 = vlaneseq
        %v527 = vshrl.u32 %v526, 7
        %v528 = vsub.s32 1, %v527
        %v529 = vrot.slane %v525, %v528
        %v530 = vlaneseq
        %v531 = vshrl.u32 %v530, 7
        %v532 = vsub.s32 3, %v531
        %v533 = vrot.slane %v525, %v532
        %v534 = vlaneseq
        %v535 = vshrl.u32 %v534, 7
        %v536 = vsub.s32 1, %v535
        %v537 = vrot.slane %v529, %v536
        %v538 = vlaneseq
        %v539 = vshrl.u32 %v538, 7
        %v540 = vsub.s32 1, %v539
        %v541 = vrot.slane %v533, %v540
        %vm542 = vcmp.eq.s32.totalorder %v228, %v537
        %vm543 = vcmp.eq.s32.totalorder %v228, %v541
        %vm544 = vcmp.eq.s32.totalorder %v229, %v537
        %vm545 = vcmp.eq.s32.totalorder %v229, %v541
        %vm546 = vcmp.eq.s32.totalorder %v230, %v537
        %vm547 = vcmp.eq.s32.totalorder %v230, %v541
        %vm548 = vcmp.eq.s32.totalorder %v231, %v537
        %vm549 = vcmp.eq.s32.totalorder %v231, %v541
        %vm550 = vcmp.eq.s32.totalorder %v232, %v537
        %vm551 = vcmp.eq.s32.totalorder %v232, %v541
        %vm552 = vcmp.eq.s32.totalorder %v233, %v537
        %vm553 = vcmp.eq.s32.totalorder %v233, %v541
        %vm554 = vcmp.eq.s32.totalorder %v234, %v537
        %vm555 = vcmp.eq.s32.totalorder %v234, %v541
        %vm556 = vcmp.eq.s32.totalorder %v235, %v537
        %vm557 = vcmp.eq.s32.totalorder %v235, %v541
        %vm558 = vcmp.eq.s32.totalorder %v236, %v537
        %vm559 = vcmp.eq.s32.totalorder %v236, %v541
        %vm560 = vcmp.eq.s32.totalorder %v237, %v537
        %vm561 = vcmp.eq.s32.totalorder %v237, %v541
        %vm562 = vcmp.eq.s32.totalorder %v238, %v537
        %vm563 = vcmp.eq.s32.totalorder %v238, %v541
        %vm564 = vcmp.eq.s32.totalorder %v239, %v537
        %vm565 = vcmp.eq.s32.totalorder %v239, %v541
        %vm566 = vcmp.eq.s32.totalorder %v240, %v537
        %vm567 = vcmp.eq.s32.totalorder %v240, %v541
        %vm568 = vcmp.eq.s32.totalorder %v241, %v537
        %vm569 = vcmp.eq.s32.totalorder %v241, %v541
        %vm570 = vcmp.eq.s32.totalorder %v242, %v537
        %vm571 = vcmp.eq.s32.totalorder %v242, %v541
        %vm572 = vcmp.eq.s32.totalorder %v243, %v537
        %vm573 = vcmp.eq.s32.totalorder %v243, %v541
        %vm574 = vcmp.eq.s32.totalorder %v244, %v537
        %vm575 = vcmp.eq.s32.totalorder %v244, %v541
        %vm576 = vcmp.eq.s32.totalorder %v245, %v537
        %vm577 = vcmp.eq.s32.totalorder %v245, %v541
        %vm578 = vcmp.eq.s32.totalorder %v246, %v537
        %vm579 = vcmp.eq.s32.totalorder %v246, %v541
        %vm580 = vcmp.eq.s32.totalorder %v247, %v537
        %vm581 = vcmp.eq.s32.totalorder %v247, %v541
        %vm582 = vcmp.eq.s32.totalorder %v248, %v537
        %vm583 = vcmp.eq.s32.totalorder %v248, %v541
        %vm584 = vcmp.eq.s32.totalorder %v249, %v537
        %vm585 = vcmp.eq.s32.totalorder %v249, %v541
        %vm586 = vcmp.eq.s32.totalorder %v250, %v537
        %vm587 = vcmp.eq.s32.totalorder %v250, %v541
        %vm588 = vcmp.eq.s32.totalorder %v251, %v537
        %vm589 = vcmp.eq.s32.totalorder %v251, %v541
        %vm590 = vcmp.eq.s32.totalorder %v252, %v537
        %vm591 = vcmp.eq.s32.totalorder %v252, %v541
        %vm592 = vcmp.eq.s32.totalorder %v253, %v537
        %vm593 = vcmp.eq.s32.totalorder %v253, %v541
        %vm594 = vcmp.eq.s32.totalorder %v254, %v537
        %vm595 = vcmp.eq.s32.totalorder %v254, %v541
        %vm596 = vcmp.eq.s32.totalorder %v255, %v537
        %vm597 = vcmp.eq.s32.totalorder %v255, %v541
        %vm598 = vcmp.eq.s32.totalorder %v256, %v537
        %vm599 = vcmp.eq.s32.totalorder %v256, %v541
        %vm600 = vcmp.eq.s32.totalorder %v257, %v537
        %vm601 = vcmp.eq.s32.totalorder %v257, %v541
        %vm602 = vcmp.eq.s32.totalorder %v258, %v537
        %vm603 = vcmp.eq.s32.totalorder %v258, %v541
        %vm604 = vcmp.eq.s32.totalorder %v259, %v537
        %vm605 = vcmp.eq.s32.totalorder %v259, %v541
        %v607 = vlaneseq
        %v608 = vshrl.u32 %v607, 7
        %v609 = vsub.s32 1, %v608
        %v610 = vrot.slane %v523, %v609
        %v611 = vlaneseq
        %v612 = vshrl.u32 %v611, 7
        %v613 = vsub.s32 3, %v612
        %v614 = vrot.slane %v523, %v613
        %v617 = vlaneseq
        %v618 = vshrl.u32 %v617, 7
        %v619 = vsub.s32 1, %v618
        %v620 = vrot.slane %v610, %v619
        %v621 = vlaneseq
        %v622 = vshrl.u32 %v621, 7
        %v623 = vsub.s32 1, %v622
        %v624 = vrot.slane %v614, %v623
        %v625 = vsel %vm542, %v620, 0.0
        %v626 = vsel %vm543, %v624, 0.0
        %v627 = vsel %vm544, %v620, 0.0
        %v628 = vsel %vm545, %v624, 0.0
        %v629 = vsel %vm546, %v620, 0.0
        %v630 = vsel %vm547, %v624, 0.0
        %v631 = vsel %vm548, %v620, 0.0
        %v632 = vsel %vm549, %v624, 0.0
        %v633 = vsel %vm550, %v620, 0.0
        %v634 = vsel %vm551, %v624, 0.0
        %v635 = vsel %vm552, %v620, 0.0
        %v636 = vsel %vm553, %v624, 0.0
        %v637 = vsel %vm554, %v620, 0.0
        %v638 = vsel %vm555, %v624, 0.0
        %v639 = vsel %vm556, %v620, 0.0
        %v640 = vsel %vm557, %v624, 0.0
        %v641 = vsel %vm558, %v620, 0.0
        %v642 = vsel %vm559, %v624, 0.0
        %v643 = vsel %vm560, %v620, 0.0
        %v644 = vsel %vm561, %v624, 0.0
        %v645 = vsel %vm562, %v620, 0.0
        %v646 = vsel %vm563, %v624, 0.0
        %v647 = vsel %vm564, %v620, 0.0
        %v648 = vsel %vm565, %v624, 0.0
        %v649 = vsel %vm566, %v620, 0.0
        %v650 = vsel %vm567, %v624, 0.0
        %v651 = vsel %vm568, %v620, 0.0
        %v652 = vsel %vm569, %v624, 0.0
        %v653 = vsel %vm570, %v620, 0.0
        %v654 = vsel %vm571, %v624, 0.0
        %v655 = vsel %vm572, %v620, 0.0
        %v656 = vsel %vm573, %v624, 0.0
        %v657 = vsel %vm574, %v620, 0.0
        %v658 = vsel %vm575, %v624, 0.0
        %v659 = vsel %vm576, %v620, 0.0
        %v660 = vsel %vm577, %v624, 0.0
        %v661 = vsel %vm578, %v620, 0.0
        %v662 = vsel %vm579, %v624, 0.0
        %v663 = vsel %vm580, %v620, 0.0
        %v664 = vsel %vm581, %v624, 0.0
        %v665 = vsel %vm582, %v620, 0.0
        %v666 = vsel %vm583, %v624, 0.0
        %v667 = vsel %vm584, %v620, 0.0
        %v668 = vsel %vm585, %v624, 0.0
        %v669 = vsel %vm586, %v620, 0.0
        %v670 = vsel %vm587, %v624, 0.0
        %v671 = vsel %vm588, %v620, 0.0
        %v672 = vsel %vm589, %v624, 0.0
        %v673 = vsel %vm590, %v620, 0.0
        %v674 = vsel %vm591, %v624, 0.0
        %v675 = vsel %vm592, %v620, 0.0
        %v676 = vsel %vm593, %v624, 0.0
        %v677 = vsel %vm594, %v620, 0.0
        %v678 = vsel %vm595, %v624, 0.0
        %v679 = vsel %vm596, %v620, 0.0
        %v680 = vsel %vm597, %v624, 0.0
        %v681 = vsel %vm598, %v620, 0.0
        %v682 = vsel %vm599, %v624, 0.0
        %v683 = vsel %vm600, %v620, 0.0
        %v684 = vsel %vm601, %v624, 0.0
        %v685 = vsel %vm602, %v620, 0.0
        %v686 = vsel %vm603, %v624, 0.0
        %v687 = vsel %vm604, %v620, 0.0
        %v688 = vsel %vm605, %v624, 0.0
        %v689 = vadd.f32 %v443, %v625
        %v690 = vadd.f32 %v444, %v626
        %v691 = vadd.f32 %v445, %v627
        %v692 = vadd.f32 %v446, %v628
        %v693 = vadd.f32 %v447, %v629
        %v694 = vadd.f32 %v448, %v630
        %v695 = vadd.f32 %v449, %v631
        %v696 = vadd.f32 %v450, %v632
        %v697 = vadd.f32 %v451, %v633
        %v698 = vadd.f32 %v452, %v634
        %v699 = vadd.f32 %v453, %v635
        %v700 = vadd.f32 %v454, %v636
        %v701 = vadd.f32 %v455, %v637
        %v702 = vadd.f32 %v456, %v638
        %v703 = vadd.f32 %v457, %v639
        %v704 = vadd.f32 %v458, %v640
        %v705 = vadd.f32 %v459, %v641
        %v706 = vadd.f32 %v460, %v642
        %v707 = vadd.f32 %v461, %v643
        %v708 = vadd.f32 %v462, %v644
        %v709 = vadd.f32 %v463, %v645
        %v710 = vadd.f32 %v464, %v646
        %v711 = vadd.f32 %v465, %v647
        %v712 = vadd.f32 %v466, %v648
        %v713 = vadd.f32 %v467, %v649
        %v714 = vadd.f32 %v468, %v650
        %v715 = vadd.f32 %v469, %v651
        %v716 = vadd.f32 %v470, %v652
        %v717 = vadd.f32 %v471, %v653
        %v718 = vadd.f32 %v472, %v654
        %v719 = vadd.f32 %v473, %v655
        %v720 = vadd.f32 %v474, %v656
        %v721 = vadd.f32 %v475, %v657
        %v722 = vadd.f32 %v476, %v658
        %v723 = vadd.f32 %v477, %v659
        %v724 = vadd.f32 %v478, %v660
        %v725 = vadd.f32 %v479, %v661
        %v726 = vadd.f32 %v480, %v662
        %v727 = vadd.f32 %v481, %v663
        %v728 = vadd.f32 %v482, %v664
        %v729 = vadd.f32 %v483, %v665
        %v730 = vadd.f32 %v484, %v666
        %v731 = vadd.f32 %v485, %v667
        %v732 = vadd.f32 %v486, %v668
        %v733 = vadd.f32 %v487, %v669
        %v734 = vadd.f32 %v488, %v670
        %v735 = vadd.f32 %v489, %v671
        %v736 = vadd.f32 %v490, %v672
        %v737 = vadd.f32 %v491, %v673
        %v738 = vadd.f32 %v492, %v674
        %v739 = vadd.f32 %v493, %v675
        %v740 = vadd.f32 %v494, %v676
        %v741 = vadd.f32 %v495, %v677
        %v742 = vadd.f32 %v496, %v678
        %v743 = vadd.f32 %v497, %v679
        %v744 = vadd.f32 %v498, %v680
        %v745 = vadd.f32 %v499, %v681
        %v746 = vadd.f32 %v500, %v682
        %v747 = vadd.f32 %v501, %v683
        %v748 = vadd.f32 %v502, %v684
        %v749 = vadd.f32 %v503, %v685
        %v750 = vadd.f32 %v504, %v686
        %v751 = vadd.f32 %v505, %v687
        %v752 = vadd.f32 %v506, %v688
        %vm753 = vmand %vm510, %vm270
        %v754 = vmul.f32 %v225, %v273
        %v755 = vsel %vm753, %v754, 0.0
        %v756 = vmul.u32 %v518, 16
        %v757 = vadd.s32 %v756, %v278
        %v758 = vlaneseq
        %v759 = vshrl.u32 %v758, 7
        %v760 = vsub.s32 1, %v759
        %v761 = vrot.slane %v757, %v760
        %v762 = vlaneseq
        %v763 = vshrl.u32 %v762, 7
        %v764 = vsub.s32 3, %v763
        %v765 = vrot.slane %v757, %v764
        %v766 = vlaneseq
        %v767 = vshrl.u32 %v766, 7
        %v768 = vsub.s32 1, %v767
        %v769 = vrot.slane %v761, %v768
        %v770 = vlaneseq
        %v771 = vshrl.u32 %v770, 7
        %v772 = vsub.s32 1, %v771
        %v773 = vrot.slane %v765, %v772
        %vm774 = vcmp.eq.s32.totalorder %v228, %v769
        %vm775 = vcmp.eq.s32.totalorder %v228, %v773
        %vm776 = vcmp.eq.s32.totalorder %v229, %v769
        %vm777 = vcmp.eq.s32.totalorder %v229, %v773
        %vm778 = vcmp.eq.s32.totalorder %v230, %v769
        %vm779 = vcmp.eq.s32.totalorder %v230, %v773
        %vm780 = vcmp.eq.s32.totalorder %v231, %v769
        %vm781 = vcmp.eq.s32.totalorder %v231, %v773
        %vm782 = vcmp.eq.s32.totalorder %v232, %v769
        %vm783 = vcmp.eq.s32.totalorder %v232, %v773
        %vm784 = vcmp.eq.s32.totalorder %v233, %v769
        %vm785 = vcmp.eq.s32.totalorder %v233, %v773
        %vm786 = vcmp.eq.s32.totalorder %v234, %v769
        %vm787 = vcmp.eq.s32.totalorder %v234, %v773
        %vm788 = vcmp.eq.s32.totalorder %v235, %v769
        %vm789 = vcmp.eq.s32.totalorder %v235, %v773
        %vm790 = vcmp.eq.s32.totalorder %v236, %v769
        %vm791 = vcmp.eq.s32.totalorder %v236, %v773
        %vm792 = vcmp.eq.s32.totalorder %v237, %v769
        %vm793 = vcmp.eq.s32.totalorder %v237, %v773
        %vm794 = vcmp.eq.s32.totalorder %v238, %v769
        %vm795 = vcmp.eq.s32.totalorder %v238, %v773
        %vm796 = vcmp.eq.s32.totalorder %v239, %v769
        %vm797 = vcmp.eq.s32.totalorder %v239, %v773
        %vm798 = vcmp.eq.s32.totalorder %v240, %v769
        %vm799 = vcmp.eq.s32.totalorder %v240, %v773
        %vm800 = vcmp.eq.s32.totalorder %v241, %v769
        %vm801 = vcmp.eq.s32.totalorder %v241, %v773
        %vm802 = vcmp.eq.s32.totalorder %v242, %v769
        %vm803 = vcmp.eq.s32.totalorder %v242, %v773
        %vm804 = vcmp.eq.s32.totalorder %v243, %v769
        %vm805 = vcmp.eq.s32.totalorder %v243, %v773
        %vm806 = vcmp.eq.s32.totalorder %v244, %v769
        %vm807 = vcmp.eq.s32.totalorder %v244, %v773
        %vm808 = vcmp.eq.s32.totalorder %v245, %v769
        %vm809 = vcmp.eq.s32.totalorder %v245, %v773
        %vm810 = vcmp.eq.s32.totalorder %v246, %v769
        %vm811 = vcmp.eq.s32.totalorder %v246, %v773
        %vm812 = vcmp.eq.s32.totalorder %v247, %v769
        %vm813 = vcmp.eq.s32.totalorder %v247, %v773
        %vm814 = vcmp.eq.s32.totalorder %v248, %v769
        %vm815 = vcmp.eq.s32.totalorder %v248, %v773
        %vm816 = vcmp.eq.s32.totalorder %v249, %v769
        %vm817 = vcmp.eq.s32.totalorder %v249, %v773
        %vm818 = vcmp.eq.s32.totalorder %v250, %v769
        %vm819 = vcmp.eq.s32.totalorder %v250, %v773
        %vm820 = vcmp.eq.s32.totalorder %v251, %v769
        %vm821 = vcmp.eq.s32.totalorder %v251, %v773
        %vm822 = vcmp.eq.s32.totalorder %v252, %v769
        %vm823 = vcmp.eq.s32.totalorder %v252, %v773
        %vm824 = vcmp.eq.s32.totalorder %v253, %v769
        %vm825 = vcmp.eq.s32.totalorder %v253, %v773
        %vm826 = vcmp.eq.s32.totalorder %v254, %v769
        %vm827 = vcmp.eq.s32.totalorder %v254, %v773
        %vm828 = vcmp.eq.s32.totalorder %v255, %v769
        %vm829 = vcmp.eq.s32.totalorder %v255, %v773
        %vm830 = vcmp.eq.s32.totalorder %v256, %v769
        %vm831 = vcmp.eq.s32.totalorder %v256, %v773
        %vm832 = vcmp.eq.s32.totalorder %v257, %v769
        %vm833 = vcmp.eq.s32.totalorder %v257, %v773
        %vm834 = vcmp.eq.s32.totalorder %v258, %v769
        %vm835 = vcmp.eq.s32.totalorder %v258, %v773
        %vm836 = vcmp.eq.s32.totalorder %v259, %v769
        %vm837 = vcmp.eq.s32.totalorder %v259, %v773
        %v839 = vlaneseq
        %v840 = vshrl.u32 %v839, 7
        %v841 = vsub.s32 1, %v840
        %v842 = vrot.slane %v755, %v841
        %v843 = vlaneseq
        %v844 = vshrl.u32 %v843, 7
        %v845 = vsub.s32 3, %v844
        %v846 = vrot.slane %v755, %v845
        %v849 = vlaneseq
        %v850 = vshrl.u32 %v849, 7
        %v851 = vsub.s32 1, %v850
        %v852 = vrot.slane %v842, %v851
        %v853 = vlaneseq
        %v854 = vshrl.u32 %v853, 7
        %v855 = vsub.s32 1, %v854
        %v856 = vrot.slane %v846, %v855
        %v857 = vsel %vm774, %v852, 0.0
        %v858 = vsel %vm775, %v856, 0.0
        %v859 = vsel %vm776, %v852, 0.0
        %v860 = vsel %vm777, %v856, 0.0
        %v861 = vsel %vm778, %v852, 0.0
        %v862 = vsel %vm779, %v856, 0.0
        %v863 = vsel %vm780, %v852, 0.0
        %v864 = vsel %vm781, %v856, 0.0
        %v865 = vsel %vm782, %v852, 0.0
        %v866 = vsel %vm783, %v856, 0.0
        %v867 = vsel %vm784, %v852, 0.0
        %v868 = vsel %vm785, %v856, 0.0
        %v869 = vsel %vm786, %v852, 0.0
        %v870 = vsel %vm787, %v856, 0.0
        %v871 = vsel %vm788, %v852, 0.0
        %v872 = vsel %vm789, %v856, 0.0
        %v873 = vsel %vm790, %v852, 0.0
        %v874 = vsel %vm791, %v856, 0.0
        %v875 = vsel %vm792, %v852, 0.0
        %v876 = vsel %vm793, %v856, 0.0
        %v877 = vsel %vm794, %v852, 0.0
        %v878 = vsel %vm795, %v856, 0.0
        %v879 = vsel %vm796, %v852, 0.0
        %v880 = vsel %vm797, %v856, 0.0
        %v881 = vsel %vm798, %v852, 0.0
        %v882 = vsel %vm799, %v856, 0.0
        %v883 = vsel %vm800, %v852, 0.0
        %v884 = vsel %vm801, %v856, 0.0
        %v885 = vsel %vm802, %v852, 0.0
        %v886 = vsel %vm803, %v856, 0.0
        %v887 = vsel %vm804, %v852, 0.0
        %v888 = vsel %vm805, %v856, 0.0
        %v889 = vsel %vm806, %v852, 0.0
        %v890 = vsel %vm807, %v856, 0.0
        %v891 = vsel %vm808, %v852, 0.0
        %v892 = vsel %vm809, %v856, 0.0
        %v893 = vsel %vm810, %v852, 0.0
        %v894 = vsel %vm811, %v856, 0.0
        %v895 = vsel %vm812, %v852, 0.0
        %v896 = vsel %vm813, %v856, 0.0
        %v897 = vsel %vm814, %v852, 0.0
        %v898 = vsel %vm815, %v856, 0.0
        %v899 = vsel %vm816, %v852, 0.0
        %v900 = vsel %vm817, %v856, 0.0
        %v901 = vsel %vm818, %v852, 0.0
        %v902 = vsel %vm819, %v856, 0.0
        %v903 = vsel %vm820, %v852, 0.0
        %v904 = vsel %vm821, %v856, 0.0
        %v905 = vsel %vm822, %v852, 0.0
        %v906 = vsel %vm823, %v856, 0.0
        %v907 = vsel %vm824, %v852, 0.0
        %v908 = vsel %vm825, %v856, 0.0
        %v909 = vsel %vm826, %v852, 0.0
        %v910 = vsel %vm827, %v856, 0.0
        %v911 = vsel %vm828, %v852, 0.0
        %v912 = vsel %vm829, %v856, 0.0
        %v913 = vsel %vm830, %v852, 0.0
        %v914 = vsel %vm831, %v856, 0.0
        %v915 = vsel %vm832, %v852, 0.0
        %v916 = vsel %vm833, %v856, 0.0
        %v917 = vsel %vm834, %v852, 0.0
        %v918 = vsel %vm835, %v856, 0.0
        %v919 = vsel %vm836, %v852, 0.0
        %v920 = vsel %vm837, %v856, 0.0
        %v921 = vadd.f32 %v689, %v857
        %v922 = vadd.f32 %v690, %v858
        %v923 = vadd.f32 %v691, %v859
        %v924 = vadd.f32 %v692, %v860
        %v925 = vadd.f32 %v693, %v861
        %v926 = vadd.f32 %v694, %v862
        %v927 = vadd.f32 %v695, %v863
        %v928 = vadd.f32 %v696, %v864
        %v929 = vadd.f32 %v697, %v865
        %v930 = vadd.f32 %v698, %v866
        %v931 = vadd.f32 %v699, %v867
        %v932 = vadd.f32 %v700, %v868
        %v933 = vadd.f32 %v701, %v869
        %v934 = vadd.f32 %v702, %v870
        %v935 = vadd.f32 %v703, %v871
        %v936 = vadd.f32 %v704, %v872
        %v937 = vadd.f32 %v705, %v873
        %v938 = vadd.f32 %v706, %v874
        %v939 = vadd.f32 %v707, %v875
        %v940 = vadd.f32 %v708, %v876
        %v941 = vadd.f32 %v709, %v877
        %v942 = vadd.f32 %v710, %v878
        %v943 = vadd.f32 %v711, %v879
        %v944 = vadd.f32 %v712, %v880
        %v945 = vadd.f32 %v713, %v881
        %v946 = vadd.f32 %v714, %v882
        %v947 = vadd.f32 %v715, %v883
        %v948 = vadd.f32 %v716, %v884
        %v949 = vadd.f32 %v717, %v885
        %v950 = vadd.f32 %v718, %v886
        %v951 = vadd.f32 %v719, %v887
        %v952 = vadd.f32 %v720, %v888
        %v953 = vadd.f32 %v721, %v889
        %v954 = vadd.f32 %v722, %v890
        %v955 = vadd.f32 %v723, %v891
        %v956 = vadd.f32 %v724, %v892
        %v957 = vadd.f32 %v725, %v893
        %v958 = vadd.f32 %v726, %v894
        %v959 = vadd.f32 %v727, %v895
        %v960 = vadd.f32 %v728, %v896
        %v961 = vadd.f32 %v729, %v897
        %v962 = vadd.f32 %v730, %v898
        %v963 = vadd.f32 %v731, %v899
        %v964 = vadd.f32 %v732, %v900
        %v965 = vadd.f32 %v733, %v901
        %v966 = vadd.f32 %v734, %v902
        %v967 = vadd.f32 %v735, %v903
        %v968 = vadd.f32 %v736, %v904
        %v969 = vadd.f32 %v737, %v905
        %v970 = vadd.f32 %v738, %v906
        %v971 = vadd.f32 %v739, %v907
        %v972 = vadd.f32 %v740, %v908
        %v973 = vadd.f32 %v741, %v909
        %v974 = vadd.f32 %v742, %v910
        %v975 = vadd.f32 %v743, %v911
        %v976 = vadd.f32 %v744, %v912
        %v977 = vadd.f32 %v745, %v913
        %v978 = vadd.f32 %v746, %v914
        %v979 = vadd.f32 %v747, %v915
        %v980 = vadd.f32 %v748, %v916
        %v981 = vadd.f32 %v749, %v917
        %v982 = vadd.f32 %v750, %v918
        %v983 = vadd.f32 %v751, %v919
        %v984 = vadd.f32 %v752, %v920
        %vm985 = vmand %vm510, %vm513
        %v986 = vmul.f32 %v225, %v520
        %v987 = vsel %vm985, %v986, 0.0
        %v988 = vadd.s32 %v756, %v524
        %v989 = vlaneseq
        %v990 = vshrl.u32 %v989, 7
        %v991 = vsub.s32 1, %v990
        %v992 = vrot.slane %v988, %v991
        %v993 = vlaneseq
        %v994 = vshrl.u32 %v993, 7
        %v995 = vsub.s32 3, %v994
        %v996 = vrot.slane %v988, %v995
        %v997 = vlaneseq
        %v998 = vshrl.u32 %v997, 7
        %v999 = vsub.s32 1, %v998
        %v1000 = vrot.slane %v992, %v999
        %v1001 = vlaneseq
        %v1002 = vshrl.u32 %v1001, 7
        %v1003 = vsub.s32 1, %v1002
        %v1004 = vrot.slane %v996, %v1003
        %vm1005 = vcmp.eq.s32.totalorder %v228, %v1000
        %vm1006 = vcmp.eq.s32.totalorder %v228, %v1004
        %vm1007 = vcmp.eq.s32.totalorder %v229, %v1000
        %vm1008 = vcmp.eq.s32.totalorder %v229, %v1004
        %vm1009 = vcmp.eq.s32.totalorder %v230, %v1000
        %vm1010 = vcmp.eq.s32.totalorder %v230, %v1004
        %vm1011 = vcmp.eq.s32.totalorder %v231, %v1000
        %vm1012 = vcmp.eq.s32.totalorder %v231, %v1004
        %vm1013 = vcmp.eq.s32.totalorder %v232, %v1000
        %vm1014 = vcmp.eq.s32.totalorder %v232, %v1004
        %vm1015 = vcmp.eq.s32.totalorder %v233, %v1000
        %vm1016 = vcmp.eq.s32.totalorder %v233, %v1004
        %vm1017 = vcmp.eq.s32.totalorder %v234, %v1000
        %vm1018 = vcmp.eq.s32.totalorder %v234, %v1004
        %vm1019 = vcmp.eq.s32.totalorder %v235, %v1000
        %vm1020 = vcmp.eq.s32.totalorder %v235, %v1004
        %vm1021 = vcmp.eq.s32.totalorder %v236, %v1000
        %vm1022 = vcmp.eq.s32.totalorder %v236, %v1004
        %vm1023 = vcmp.eq.s32.totalorder %v237, %v1000
        %vm1024 = vcmp.eq.s32.totalorder %v237, %v1004
        %vm1025 = vcmp.eq.s32.totalorder %v238, %v1000
        %vm1026 = vcmp.eq.s32.totalorder %v238, %v1004
        %vm1027 = vcmp.eq.s32.totalorder %v239, %v1000
        %vm1028 = vcmp.eq.s32.totalorder %v239, %v1004
        %vm1029 = vcmp.eq.s32.totalorder %v240, %v1000
        %vm1030 = vcmp.eq.s32.totalorder %v240, %v1004
        %vm1031 = vcmp.eq.s32.totalorder %v241, %v1000
        %vm1032 = vcmp.eq.s32.totalorder %v241, %v1004
        %vm1033 = vcmp.eq.s32.totalorder %v242, %v1000
        %vm1034 = vcmp.eq.s32.totalorder %v242, %v1004
        %vm1035 = vcmp.eq.s32.totalorder %v243, %v1000
        %vm1036 = vcmp.eq.s32.totalorder %v243, %v1004
        %vm1037 = vcmp.eq.s32.totalorder %v244, %v1000
        %vm1038 = vcmp.eq.s32.totalorder %v244, %v1004
        %vm1039 = vcmp.eq.s32.totalorder %v245, %v1000
        %vm1040 = vcmp.eq.s32.totalorder %v245, %v1004
        %vm1041 = vcmp.eq.s32.totalorder %v246, %v1000
        %vm1042 = vcmp.eq.s32.totalorder %v246, %v1004
        %vm1043 = vcmp.eq.s32.totalorder %v247, %v1000
        %vm1044 = vcmp.eq.s32.totalorder %v247, %v1004
        %vm1045 = vcmp.eq.s32.totalorder %v248, %v1000
        %vm1046 = vcmp.eq.s32.totalorder %v248, %v1004
        %vm1047 = vcmp.eq.s32.totalorder %v249, %v1000
        %vm1048 = vcmp.eq.s32.totalorder %v249, %v1004
        %vm1049 = vcmp.eq.s32.totalorder %v250, %v1000
        %vm1050 = vcmp.eq.s32.totalorder %v250, %v1004
        %vm1051 = vcmp.eq.s32.totalorder %v251, %v1000
        %vm1052 = vcmp.eq.s32.totalorder %v251, %v1004
        %vm1053 = vcmp.eq.s32.totalorder %v252, %v1000
        %vm1054 = vcmp.eq.s32.totalorder %v252, %v1004
        %vm1055 = vcmp.eq.s32.totalorder %v253, %v1000
        %vm1056 = vcmp.eq.s32.totalorder %v253, %v1004
        %vm1057 = vcmp.eq.s32.totalorder %v254, %v1000
        %vm1058 = vcmp.eq.s32.totalorder %v254, %v1004
        %vm1059 = vcmp.eq.s32.totalorder %v255, %v1000
        %vm1060 = vcmp.eq.s32.totalorder %v255, %v1004
        %vm1061 = vcmp.eq.s32.totalorder %v256, %v1000
        %vm1062 = vcmp.eq.s32.totalorder %v256, %v1004
        %vm1063 = vcmp.eq.s32.totalorder %v257, %v1000
        %vm1064 = vcmp.eq.s32.totalorder %v257, %v1004
        %vm1065 = vcmp.eq.s32.totalorder %v258, %v1000
        %vm1066 = vcmp.eq.s32.totalorder %v258, %v1004
        %vm1067 = vcmp.eq.s32.totalorder %v259, %v1000
        %vm1068 = vcmp.eq.s32.totalorder %v259, %v1004
        %v1070 = vlaneseq
        %v1071 = vshrl.u32 %v1070, 7
        %v1072 = vsub.s32 1, %v1071
        %v1073 = vrot.slane %v987, %v1072
        %v1074 = vlaneseq
        %v1075 = vshrl.u32 %v1074, 7
        %v1076 = vsub.s32 3, %v1075
        %v1077 = vrot.slane %v987, %v1076
        %v1080 = vlaneseq
        %v1081 = vshrl.u32 %v1080, 7
        %v1082 = vsub.s32 1, %v1081
        %v1083 = vrot.slane %v1073, %v1082
        %v1084 = vlaneseq
        %v1085 = vshrl.u32 %v1084, 7
        %v1086 = vsub.s32 1, %v1085
        %v1087 = vrot.slane %v1077, %v1086
        %v1088 = vsel %vm1005, %v1083, 0.0
        %v1089 = vsel %vm1006, %v1087, 0.0
        %v1090 = vsel %vm1007, %v1083, 0.0
        %v1091 = vsel %vm1008, %v1087, 0.0
        %v1092 = vsel %vm1009, %v1083, 0.0
        %v1093 = vsel %vm1010, %v1087, 0.0
        %v1094 = vsel %vm1011, %v1083, 0.0
        %v1095 = vsel %vm1012, %v1087, 0.0
        %v1096 = vsel %vm1013, %v1083, 0.0
        %v1097 = vsel %vm1014, %v1087, 0.0
        %v1098 = vsel %vm1015, %v1083, 0.0
        %v1099 = vsel %vm1016, %v1087, 0.0
        %v1100 = vsel %vm1017, %v1083, 0.0
        %v1101 = vsel %vm1018, %v1087, 0.0
        %v1102 = vsel %vm1019, %v1083, 0.0
        %v1103 = vsel %vm1020, %v1087, 0.0
        %v1104 = vsel %vm1021, %v1083, 0.0
        %v1105 = vsel %vm1022, %v1087, 0.0
        %v1106 = vsel %vm1023, %v1083, 0.0
        %v1107 = vsel %vm1024, %v1087, 0.0
        %v1108 = vsel %vm1025, %v1083, 0.0
        %v1109 = vsel %vm1026, %v1087, 0.0
        %v1110 = vsel %vm1027, %v1083, 0.0
        %v1111 = vsel %vm1028, %v1087, 0.0
        %v1112 = vsel %vm1029, %v1083, 0.0
        %v1113 = vsel %vm1030, %v1087, 0.0
        %v1114 = vsel %vm1031, %v1083, 0.0
        %v1115 = vsel %vm1032, %v1087, 0.0
        %v1116 = vsel %vm1033, %v1083, 0.0
        %v1117 = vsel %vm1034, %v1087, 0.0
        %v1118 = vsel %vm1035, %v1083, 0.0
        %v1119 = vsel %vm1036, %v1087, 0.0
        %v1120 = vsel %vm1037, %v1083, 0.0
        %v1121 = vsel %vm1038, %v1087, 0.0
        %v1122 = vsel %vm1039, %v1083, 0.0
        %v1123 = vsel %vm1040, %v1087, 0.0
        %v1124 = vsel %vm1041, %v1083, 0.0
        %v1125 = vsel %vm1042, %v1087, 0.0
        %v1126 = vsel %vm1043, %v1083, 0.0
        %v1127 = vsel %vm1044, %v1087, 0.0
        %v1128 = vsel %vm1045, %v1083, 0.0
        %v1129 = vsel %vm1046, %v1087, 0.0
        %v1130 = vsel %vm1047, %v1083, 0.0
        %v1131 = vsel %vm1048, %v1087, 0.0
        %v1132 = vsel %vm1049, %v1083, 0.0
        %v1133 = vsel %vm1050, %v1087, 0.0
        %v1134 = vsel %vm1051, %v1083, 0.0
        %v1135 = vsel %vm1052, %v1087, 0.0
        %v1136 = vsel %vm1053, %v1083, 0.0
        %v1137 = vsel %vm1054, %v1087, 0.0
        %v1138 = vsel %vm1055, %v1083, 0.0
        %v1139 = vsel %vm1056, %v1087, 0.0
        %v1140 = vsel %vm1057, %v1083, 0.0
        %v1141 = vsel %vm1058, %v1087, 0.0
        %v1142 = vsel %vm1059, %v1083, 0.0
        %v1143 = vsel %vm1060, %v1087, 0.0
        %v1144 = vsel %vm1061, %v1083, 0.0
        %v1145 = vsel %vm1062, %v1087, 0.0
        %v1146 = vsel %vm1063, %v1083, 0.0
        %v1147 = vsel %vm1064, %v1087, 0.0
        %v1148 = vsel %vm1065, %v1083, 0.0
        %v1149 = vsel %vm1066, %v1087, 0.0
        %v1150 = vsel %vm1067, %v1083, 0.0
        %v1151 = vsel %vm1068, %v1087, 0.0
        %v1152 = vadd.f32 %v921, %v1088
        %v1153 = vadd.f32 %v922, %v1089
        %v1154 = vadd.f32 %v923, %v1090
        %v1155 = vadd.f32 %v924, %v1091
        %v1156 = vadd.f32 %v925, %v1092
        %v1157 = vadd.f32 %v926, %v1093
        %v1158 = vadd.f32 %v927, %v1094
        %v1159 = vadd.f32 %v928, %v1095
        %v1160 = vadd.f32 %v929, %v1096
        %v1161 = vadd.f32 %v930, %v1097
        %v1162 = vadd.f32 %v931, %v1098
        %v1163 = vadd.f32 %v932, %v1099
        %v1164 = vadd.f32 %v933, %v1100
        %v1165 = vadd.f32 %v934, %v1101
        %v1166 = vadd.f32 %v935, %v1102
        %v1167 = vadd.f32 %v936, %v1103
        %v1168 = vadd.f32 %v937, %v1104
        %v1169 = vadd.f32 %v938, %v1105
        %v1170 = vadd.f32 %v939, %v1106
        %v1171 = vadd.f32 %v940, %v1107
        %v1172 = vadd.f32 %v941, %v1108
        %v1173 = vadd.f32 %v942, %v1109
        %v1174 = vadd.f32 %v943, %v1110
        %v1175 = vadd.f32 %v944, %v1111
        %v1176 = vadd.f32 %v945, %v1112
        %v1177 = vadd.f32 %v946, %v1113
        %v1178 = vadd.f32 %v947, %v1114
        %v1179 = vadd.f32 %v948, %v1115
        %v1180 = vadd.f32 %v949, %v1116
        %v1181 = vadd.f32 %v950, %v1117
        %v1182 = vadd.f32 %v951, %v1118
        %v1183 = vadd.f32 %v952, %v1119
        %v1184 = vadd.f32 %v953, %v1120
        %v1185 = vadd.f32 %v954, %v1121
        %v1186 = vadd.f32 %v955, %v1122
        %v1187 = vadd.f32 %v956, %v1123
        %v1188 = vadd.f32 %v957, %v1124
        %v1189 = vadd.f32 %v958, %v1125
        %v1190 = vadd.f32 %v959, %v1126
        %v1191 = vadd.f32 %v960, %v1127
        %v1192 = vadd.f32 %v961, %v1128
        %v1193 = vadd.f32 %v962, %v1129
        %v1194 = vadd.f32 %v963, %v1130
        %v1195 = vadd.f32 %v964, %v1131
        %v1196 = vadd.f32 %v965, %v1132
        %v1197 = vadd.f32 %v966, %v1133
        %v1198 = vadd.f32 %v967, %v1134
        %v1199 = vadd.f32 %v968, %v1135
        %v1200 = vadd.f32 %v969, %v1136
        %v1201 = vadd.f32 %v970, %v1137
        %v1202 = vadd.f32 %v971, %v1138
        %v1203 = vadd.f32 %v972, %v1139
        %v1204 = vadd.f32 %v973, %v1140
        %v1205 = vadd.f32 %v974, %v1141
        %v1206 = vadd.f32 %v975, %v1142
        %v1207 = vadd.f32 %v976, %v1143
        %v1208 = vadd.f32 %v977, %v1144
        %v1209 = vadd.f32 %v978, %v1145
        %v1210 = vadd.f32 %v979, %v1146
        %v1211 = vadd.f32 %v980, %v1147
        %v1212 = vadd.f32 %v981, %v1148
        %v1213 = vadd.f32 %v982, %v1149
        %v1214 = vadd.f32 %v983, %v1150
        %v1215 = vadd.f32 %v984, %v1151
        %v1217 = vcombine.high %v218, %v218
        %1219 = vmatprep.subr.mxu0 %v1153
        %1220 = vmatpush1.msra.mxu0 %v1152
        %1221 = vmatprep.subr.mxu0 %v1155
        %1222 = vmatpush1.msra.mxu0 %v1154
        %1223 = vmatprep.subr.mxu0 %v1157
        %1224 = vmatpush1.msra.mxu0 %v1156
        %1225 = vmatprep.subr.mxu0 %v1159
        %1226 = vmatpush1.msra.mxu0 %v1158
        %1227 = vmatprep.subr.mxu0 %v1161
        %1228 = vmatpush1.msra.mxu0 %v1160
        %1229 = vmatprep.subr.mxu0 %v1163
        %1230 = vmatpush1.msra.mxu0 %v1162
        %1231 = vmatprep.subr.mxu0 %v1165
        %1232 = vmatpush1.msra.mxu0 %v1164
        %1233 = vmatprep.subr.mxu0 %v1167
        %1234 = vmatpush1.msra.mxu0 %v1166
        %1235 = vmatprep.subr.mxu0 %v1169
        %1236 = vmatpush1.msra.mxu0 %v1168
        %1237 = vmatprep.subr.mxu0 %v1171
        %1238 = vmatpush1.msra.mxu0 %v1170
        %1239 = vmatprep.subr.mxu0 %v1173
        %1240 = vmatpush1.msra.mxu0 %v1172
        %1241 = vmatprep.subr.mxu0 %v1175
        %1242 = vmatpush1.msra.mxu0 %v1174
        %1243 = vmatprep.subr.mxu0 %v1177
        %1244 = vmatpush1.msra.mxu0 %v1176
        %1245 = vmatprep.subr.mxu0 %v1179
        %1246 = vmatpush1.msra.mxu0 %v1178
        %1247 = vmatprep.subr.mxu0 %v1181
        %1248 = vmatpush1.msra.mxu0 %v1180
        %1249 = vmatprep.subr.mxu0 %v1183
        %1250 = vmatpush1.msra.mxu0 %v1182
        %1251 = vmatprep.subr.mxu0 %v1185
        %1252 = vmatpush1.msra.mxu0 %v1184
        %1253 = vmatprep.subr.mxu0 %v1187
        %1254 = vmatpush1.msra.mxu0 %v1186
        %1255 = vmatprep.subr.mxu0 %v1189
        %1256 = vmatpush1.msra.mxu0 %v1188
        %1257 = vmatprep.subr.mxu0 %v1191
        %1258 = vmatpush1.msra.mxu0 %v1190
        %1259 = vmatprep.subr.mxu0 %v1193
        %1260 = vmatpush1.msra.mxu0 %v1192
        %1261 = vmatprep.subr.mxu0 %v1195
        %1262 = vmatpush1.msra.mxu0 %v1194
        %1263 = vmatprep.subr.mxu0 %v1197
        %1264 = vmatpush1.msra.mxu0 %v1196
        %1265 = vmatprep.subr.mxu0 %v1199
        %1266 = vmatpush1.msra.mxu0 %v1198
        %1267 = vmatprep.subr.mxu0 %v1201
        %1268 = vmatpush1.msra.mxu0 %v1200
        %1269 = vmatprep.subr.mxu0 %v1203
        %1270 = vmatpush1.msra.mxu0 %v1202
        %1271 = vmatprep.subr.mxu0 %v1205
        %1272 = vmatpush1.msra.mxu0 %v1204
        %1273 = vmatprep.subr.mxu0 %v1207
        %1274 = vmatpush1.msra.mxu0 %v1206
        %1275 = vmatprep.subr.mxu0 %v1209
        %1276 = vmatpush1.msra.mxu0 %v1208
        %1277 = vmatprep.subr.mxu0 %v1211
        %1278 = vmatpush1.msra.mxu0 %v1210
        %1279 = vmatprep.subr.mxu0 %v1213
        %1280 = vmatpush1.msra.mxu0 %v1212
        %1281 = vmatprep.subr.mxu0 %v1215
        %1282 = vmatpush1.msra.mxu0 %v1214
        %1283 = vmatprep.mubr.f32.mxu0 %v1217
        %1284 = vmatmul.mubr.f32.gmra.mrb[0].mxu0 %v218
        %v1285 = vpop.f32.mrb[0].mxu0
        %v1286 = vadd.f32 0.0, %v1285
        %v1287 = vpop.f32.mrb[0].mxu0
        %v1288 = vadd.f32 0.0, %v1287
        %1289 = vdwg.mxu0
        %v1292 = vcombine.low %v1286, %v1288
        %1294 = vst [vmem:[%s215] sm:$0xff] %v1292
        %s1295 = sand.u32 %s98, 1
        %s1296 = scalar_lea.sflag [#allocation4], %s1295
        %s1297 = sand.u32 %s98, 1
        %s1298 = smul.addr %s1297, 8
        %s1299 = scalar_lea.vmem [#allocation7], %s1298
        // Predicated region
        $region37: #{tpu_custom_call.1} parent=27 // pred_check
          %p1300 = pneg %p108
        $region38: #{tpu_custom_call.1} parent=27 // pred_check_branch
          %1302 = sbr.rel (%p1300) target = $region40
        $region39: #{tpu_custom_call.1} parent=27 // pred_region
          %s1303 = smul.u32 2, %s27
          %s1305 = ssub.s32 128, 128
          %1306 = vsyncadd %s1296, %s1305
          %s1307 = smul.addr %s26, 2
          %s1308 = sadd.s32 %s1303, %s1307
          %s1309 = smul.addr %s1308, 64
          %s1310 = scalar_lea.hbm %s2, %s1309
          %s1312 = sshll.u32 %s1299, 4
          %s1313 = int_to_ptr.vmem [resolvable:$true] %s1312
          %1315 = dma.vmem_to_hbm [thread:$0]  %s1313, 128, %s1310, %s1296
        $region40: #{tpu_custom_call.1} parent=27 // pred_fallthru
          _
      $region28: #{tpu_custom_call.1} parent=5 // pred_fallthru
        _
      %p1316 = scmp.le.s32.totalorder 2, %s17
      // Predicated region
      $region41: #{tpu_custom_call.1} parent=5 // pred_check
        %p1317 = pneg %p1316
      $region42: #{tpu_custom_call.1} parent=5 // pred_check_branch
        %1319 = sbr.rel (%p1317) target = $region44
      $region43: #{tpu_custom_call.1} parent=5 // pred_region
        %s1320 = ssub.s32 %s17, 2
        // Predicated region
        $region45: #{tpu_custom_call.1} parent=43 // pred_check
          %p1321 = pneg %p114
        $region46: #{tpu_custom_call.1} parent=43 // pred_check_branch
          %1323 = sbr.rel (%p1321) target = $region48
        $region47: #{tpu_custom_call.1} parent=43 // pred_region
          %s1324 = sand.u32 %s99, 1
          %s1325 = scalar_lea.sflag [#allocation4], %s1324
          %s1326 = sand.u32 %s99, 1
          %s1327 = smul.addr %s1326, 8
          %s1328 = scalar_lea.vmem [#allocation7], %s1327
          %1329 = dma.done %s1325, 128
        $region48: #{tpu_custom_call.1} parent=43 // pred_fallthru
          _
      $region44: #{tpu_custom_call.1} parent=5 // pred_fallthru
        _
    $region6: #{tpu_custom_call.1} parent=1 // loop_footer
      %s21 = sadd.s32 1, %s17
    $region7: #{tpu_custom_call.1} parent=1 // loop_footer_branch
      %16 = sbr.rel target = $region3
    $region8: #{tpu_custom_call.1} parent=1 // loop_exit
      _
    %1330 = vsyncpa [#allocation3], 1
    %s1331 = scalar_lea.sflag [#allocation3], 1
    %1332 = vsyncpa %s1331, 1
    %1333 = vsyncpa [#allocation6], 1
    %s1334 = scalar_lea.sflag [#allocation6], 1
    %1335 = vsyncpa %s1334, 1
    %1336 = vsyncpa [#allocation4], 1
    %s1337 = scalar_lea.sflag [#allocation4], 1
    %1338 = vsyncpa %s1337, 1

</llo_original>
